<compile_context>
chip_gen: v5e
topology: v5e:2x2
jax: 0.10.0
libtpu: 0.0.40
codegen_flags: <defaults>
</compile_context>

<pallas_src>
import jax
import jax.numpy as jnp
from jax.experimental import pallas as pl
from jax.experimental.pallas import tpu as pltpu

# ---- model hyper-parameters (small, consistent with the module) -------------
N_NODES = 16          # number of sentence nodes per graph
IN_CH = 32            # in_channels
HIDDEN = 64           # hidden_channels
OUT_CH = 4            # out_channels
NUM_LAYERS = 3
HEADS = 8
HEAD_DIM = HIDDEN // HEADS
NEG_SLOPE = 0.2       # GATConv default LeakyReLU slope
LN_EPS = 1e-5
HN = HEADS * N_NODES  # fused attention lane width (= 128 exactly)


def _gnn_kernel(x_ref, adjb_ref,
                wp_ref, bp_ref,
                gw_ref, asrc_ref, adst_ref, gb_ref,
                gamma_ref, beta_ref,
                w1_ref, b1_ref, w2_ref, b2_ref,
                segrep_ref, segsum_ref, diagrep_ref, rowexp_ref, hmask_ref,
                out_ref):
    f32 = jnp.float32
    x = x_ref[0]                       # [N, IN_CH]
    adj_bias = adjb_ref[0]             # [N_tgt, N_src], 0 / -1e30

    # constant expansion / reduction matrices (0/1), built in the wrapper
    seg_rep = segrep_ref[...]          # [H, H*N]    : (h, h'*N+j) = (h==h')
    seg_sum = segsum_ref[...]          # [H*N, H]    : seg_rep.T
    diag_rep = diagrep_ref[...]        # [N, H*N]    : (j, h*N+j') = (j==j')
    row_expand = rowexp_ref[...]       # [H*N, N]    : diag_rep.T
    head_mask = hmask_ref[...]         # [H*N, HIDDEN]: (h*N+j, h'*D+d) = (h==h')

    # additive edge mask broadcast to the fused head layout, once per graph
    bias_rep = jnp.dot(adj_bias, diag_rep, preferred_element_type=f32)  # [N, H*N]

    # input projection + ReLU
    h = jnp.dot(x, wp_ref[...], preferred_element_type=f32) + bp_ref[...]
    h = jnp.maximum(h, 0.0)            # [N, HIDDEN]

    for l in range(NUM_LAYERS):
        h_res = h
        # shared linear transform for all heads
        xw = jnp.dot(h, gw_ref[l], preferred_element_type=f32)          # [N, HIDDEN]

        # per-head attention coefficients via block matmuls (no XLU reductions)
        a_dst = jnp.dot(xw, adst_ref[l], preferred_element_type=f32)    # [N, H]
        a_src = jnp.dot(xw, asrc_ref[l], preferred_element_type=f32)    # [N, H]

        # fused scores: e[i, h*N+j] = a_dst[i, h] + a_src[j, h]
        dst_rep = jnp.dot(a_dst, seg_rep, preferred_element_type=f32)   # [N, H*N]
        src_row = jnp.sum(
            jnp.dot(a_src, seg_rep, preferred_element_type=f32) * diag_rep,
            axis=0, keepdims=True)                                      # [1, H*N]
        e = dst_rep + src_row                                           # [16, 128]
        e = jnp.where(e > 0, e, NEG_SLOPE * e)                          # LeakyReLU
        e = e + bias_rep                                                # additive mask

        # per-head softmax over source nodes (row-max shift shared across heads)
        e = e - jnp.max(e, axis=1, keepdims=True)
        p = jnp.exp(e)                                                  # [16, 128]
        denom = jnp.dot(p, seg_sum, preferred_element_type=f32)         # [N, H]
        inv = pl.reciprocal(denom, approx=True)                         # EUP
        p = p * jnp.dot(inv, seg_rep, preferred_element_type=f32)       # normalized

        # aggregate all heads with one contraction: [16,128] @ [128,64]
        xw_exp = jnp.dot(row_expand, xw, preferred_element_type=f32) * head_mask
        h = jnp.dot(p, xw_exp, preferred_element_type=f32) + gb_ref[l]  # + GAT bias
        h = h + h_res                                                   # residual

        # LayerNorm over features + ReLU
        mu = jnp.mean(h, axis=-1, keepdims=True)
        var = jnp.mean((h - mu) ** 2, axis=-1, keepdims=True)
        h = (h - mu) / jnp.sqrt(var + LN_EPS)
        h = h * gamma_ref[l] + beta_ref[l]
        h = jnp.maximum(h, 0.0)

    # classifier: Linear -> ReLU -> Linear  (dropouts are identity in eval)
    z = jnp.dot(h, w1_ref[...], preferred_element_type=f32) + b1_ref[...]
    z = jnp.maximum(z, 0.0)
    logits = jnp.dot(z, w2_ref[...], preferred_element_type=f32) + b2_ref[...]

    # log_softmax over dim=1 (classes)
    m = jnp.max(logits, axis=1, keepdims=True)
    lse = jnp.log(jnp.sum(jnp.exp(logits - m), axis=1, keepdims=True)) + m
    out_ref[0] = logits - lse


def _block_attn_matrix(ga):
    """[L, HEADS, D] -> [L, HIDDEN, HEADS] with A[l, h*D+d, h'] = ga[l,h,d]*(h==h')."""
    eye_h = jnp.eye(HEADS, dtype=ga.dtype)
    a = ga[:, :, :, None] * eye_h[None, :, None, :]       # [L, H, D, H]
    return a.reshape(NUM_LAYERS, HIDDEN, HEADS)


def sentence_graph_gnn_forward(x, adj_bias, params):
    """x: [B, N, IN_CH]; adj_bias: [B, N, N] additive mask (0 edge / -1e30)."""
    B = x.shape[0]

    # wrapper-side param prep (block attention matrices + constant 0/1 layouts)
    a_src_m = _block_attn_matrix(params["gas"])           # [L, HIDDEN, H]
    a_dst_m = _block_attn_matrix(params["gad"])           # [L, HIDDEN, H]
    eye_h = jnp.eye(HEADS, dtype=jnp.float32)
    eye_n = jnp.eye(N_NODES, dtype=jnp.float32)
    seg_rep = jnp.repeat(eye_h, N_NODES, axis=1)          # [H, H*N]
    seg_sum = seg_rep.T                                   # [H*N, H]
    diag_rep = jnp.tile(eye_n, (1, HEADS))                # [N, H*N]
    row_expand = diag_rep.T                               # [H*N, N]
    head_mask = jnp.repeat(jnp.repeat(eye_h, N_NODES, axis=0),
                           HEAD_DIM, axis=1)              # [H*N, HIDDEN]
    gb = params["gb"].reshape(NUM_LAYERS, 1, HIDDEN)
    gamma = params["gamma"].reshape(NUM_LAYERS, 1, HIDDEN)
    beta = params["beta"].reshape(NUM_LAYERS, 1, HIDDEN)

    weights = (params["wp"], params["bp"],
               params["gw"], a_src_m, a_dst_m, gb, gamma, beta,
               params["w1"], params["b1"], params["w2"], params["b2"],
               seg_rep, seg_sum, diag_rep, row_expand, head_mask)

    def _full_spec(a):
        nd = a.ndim
        return pl.BlockSpec(a.shape, lambda b, _nd=nd: (0,) * _nd)

    in_specs = [
        pl.BlockSpec((1, N_NODES, IN_CH), lambda b: (b, 0, 0)),
        pl.BlockSpec((1, N_NODES, N_NODES), lambda b: (b, 0, 0)),
    ] + [_full_spec(w) for w in weights]
    out_spec = pl.BlockSpec((1, N_NODES, OUT_CH), lambda b: (b, 0, 0))

    return pl.pallas_call(
        _gnn_kernel,
        grid=(B,),
        out_shape=jax.ShapeDtypeStruct((B, N_NODES, OUT_CH), jnp.float32),
        in_specs=in_specs,
        out_specs=out_spec,
        compiler_params=pltpu.CompilerParams(
            dimension_semantics=("parallel",)),
    )(x, adj_bias, *weights)


def _reference_forward(x, adj, p):
    """Pure-JAX per-graph mirror of the module math for a correctness check."""
    h = jnp.maximum(x @ p["wp"] + p["bp"], 0.0)
    for l in range(NUM_LAYERS):
        h_res = h
        xw = h @ p["gw"][l]
        outs = []
        for hd in range(HEADS):
            xw_h = xw[:, hd * HEAD_DIM:(hd + 1) * HEAD_DIM]
            a_src = jnp.sum(xw_h * p["gas"][l, hd][None, :], axis=-1)
            a_dst = jnp.sum(xw_h * p["gad"][l, hd][None, :], axis=-1)
            e = a_dst[:, None] + a_src[None, :]
            e = jnp.where(e > 0, e, NEG_SLOPE * e)
            e = jnp.where(adj > 0, e, -1e30)
            e = e - jnp.max(e, axis=1, keepdims=True)
            pr = jnp.exp(e)
            pr = pr / jnp.sum(pr, axis=1, keepdims=True)
            outs.append(pr @ xw_h)
        h = jnp.concatenate(outs, axis=-1) + p["gb"][l][None, :] + h_res
        mu = jnp.mean(h, axis=-1, keepdims=True)
        var = jnp.mean((h - mu) ** 2, axis=-1, keepdims=True)
        h = (h - mu) / jnp.sqrt(var + LN_EPS)
        h = h * p["gamma"][l][None, :] + p["beta"][l][None, :]
        h = jnp.maximum(h, 0.0)
    z = jnp.maximum(h @ p["w1"] + p["b1"], 0.0)
    logits = z @ p["w2"] + p["b2"]
    return jax.nn.log_softmax(logits, axis=1)


def _init_params(key):
    ks = jax.random.split(key, 10)
    s = 0.1
    return {
        "wp": jax.random.normal(ks[0], (IN_CH, HIDDEN), jnp.float32) * s,
        "bp": jax.random.normal(ks[1], (1, HIDDEN), jnp.float32) * s,
        "gw": jax.random.normal(ks[2], (NUM_LAYERS, HIDDEN, HIDDEN), jnp.float32) * s,
        "gas": jax.random.normal(ks[3], (NUM_LAYERS, HEADS, HEAD_DIM), jnp.float32) * s,
        "gad": jax.random.normal(ks[4], (NUM_LAYERS, HEADS, HEAD_DIM), jnp.float32) * s,
        "gb": jax.random.normal(ks[5], (NUM_LAYERS, HIDDEN), jnp.float32) * s,
        "gamma": jnp.ones((NUM_LAYERS, HIDDEN), jnp.float32),
        "beta": jnp.zeros((NUM_LAYERS, HIDDEN), jnp.float32),
        "w1": jax.random.normal(ks[6], (HIDDEN, HIDDEN // 2), jnp.float32) * s,
        "b1": jax.random.normal(ks[7], (1, HIDDEN // 2), jnp.float32) * s,
        "w2": jax.random.normal(ks[8], (HIDDEN // 2, OUT_CH), jnp.float32) * s,
        "b2": jax.random.normal(ks[9], (1, OUT_CH), jnp.float32) * s,
    }


if __name__ == "__main__":
    key = jax.random.PRNGKey(0)
    k_x, k_e1, k_e2, k_p = jax.random.split(key, 4)

    B = 4                     # batch of sentence graphs (grid axis, "parallel")
    n_edges = 32

    # node features (data.x) and deterministic random edge_index per graph
    x = jax.random.normal(k_x, (B, N_NODES, IN_CH), jnp.float32)
    src = jax.random.randint(k_e1, (B, n_edges), 0, N_NODES)
    tgt = jax.random.randint(k_e2, (B, n_edges), 0, N_NODES)
    b_idx = jnp.broadcast_to(jnp.arange(B)[:, None], (B, n_edges))

    # dense per-graph adjacency adj[b, target, source] with self-loops
    adj = jnp.zeros((B, N_NODES, N_NODES), jnp.float32)
    adj = adj.at[b_idx, tgt, src].set(1.0)
    adj = jnp.maximum(adj, jnp.eye(N_NODES, dtype=jnp.float32)[None])
    # additive mask for the kernel (0 on edges, -1e30 elsewhere)
    adj_bias = jnp.where(adj > 0, 0.0, -1e30).astype(jnp.float32)

    params = _init_params(k_p)

    out = jax.block_until_ready(sentence_graph_gnn_forward(x, adj_bias, params))

    ref = jax.block_until_ready(
        jax.vmap(_reference_forward, in_axes=(0, 0, None))(x, adj, params))

    assert out.shape == (B, N_NODES, OUT_CH)
    assert jnp.allclose(out, ref, rtol=5e-3, atol=5e-3), "mismatch vs reference"

    print("KERNEL_OK")
</pallas_src>

<mosaic_0001>
module attributes {stable_mosaic.version = 11 : i64} {
  func.func @_gnn_kernel(%arg0: i32, %arg1: memref<1x16x32xf32, #tpu.memory_space<vmem>>, %arg2: memref<1x16x16xf32, #tpu.memory_space<vmem>>, %arg3: memref<32x64xf32, #tpu.memory_space<vmem>>, %arg4: memref<1x64xf32, #tpu.memory_space<vmem>>, %arg5: memref<3x64x64xf32, #tpu.memory_space<vmem>>, %arg6: memref<3x64x8xf32, #tpu.memory_space<vmem>>, %arg7: memref<3x64x8xf32, #tpu.memory_space<vmem>>, %arg8: memref<3x1x64xf32, #tpu.memory_space<vmem>>, %arg9: memref<3x1x64xf32, #tpu.memory_space<vmem>>, %arg10: memref<3x1x64xf32, #tpu.memory_space<vmem>>, %arg11: memref<64x32xf32, #tpu.memory_space<vmem>>, %arg12: memref<1x32xf32, #tpu.memory_space<vmem>>, %arg13: memref<32x4xf32, #tpu.memory_space<vmem>>, %arg14: memref<1x4xf32, #tpu.memory_space<vmem>>, %arg15: memref<8x128xf32, #tpu.memory_space<vmem>>, %arg16: memref<128x8xf32, #tpu.memory_space<vmem>>, %arg17: memref<16x128xf32, #tpu.memory_space<vmem>>, %arg18: memref<128x16xf32, #tpu.memory_space<vmem>>, %arg19: memref<128x64xf32, #tpu.memory_space<vmem>>, %arg20: memref<1x16x4xf32, #tpu.memory_space<vmem>>) attributes {dimension_semantics = [#tpu.dimension_semantics<parallel>], iteration_bounds = array<i64: 4>, scalar_prefetch = 0 : i64, scratch_operands = 0 : i64, tpu.core_type = #tpu.core_type<tc>, window_params = [{transform_indices = @transform_0, window_bounds = array<i64: 1, 16, 32>}, {transform_indices = @transform_1, window_bounds = array<i64: 1, 16, 16>}, {pipeline_mode = #tpu.pipeline_mode<synchronous>, transform_indices = @transform_2, window_bounds = array<i64: 32, 64>}, {pipeline_mode = #tpu.pipeline_mode<synchronous>, transform_indices = @transform_3, window_bounds = array<i64: 1, 64>}, {pipeline_mode = #tpu.pipeline_mode<synchronous>, transform_indices = @transform_4, window_bounds = array<i64: 3, 64, 64>}, {pipeline_mode = #tpu.pipeline_mode<synchronous>, transform_indices = @transform_5, window_bounds = array<i64: 3, 64, 8>}, {pipeline_mode = #tpu.pipeline_mode<synchronous>, transform_indices = @transform_6, window_bounds = array<i64: 3, 64, 8>}, {pipeline_mode = #tpu.pipeline_mode<synchronous>, transform_indices = @transform_7, window_bounds = array<i64: 3, 1, 64>}, {pipeline_mode = #tpu.pipeline_mode<synchronous>, transform_indices = @transform_8, window_bounds = array<i64: 3, 1, 64>}, {pipeline_mode = #tpu.pipeline_mode<synchronous>, transform_indices = @transform_9, window_bounds = array<i64: 3, 1, 64>}, {pipeline_mode = #tpu.pipeline_mode<synchronous>, transform_indices = @transform_10, window_bounds = array<i64: 64, 32>}, {pipeline_mode = #tpu.pipeline_mode<synchronous>, transform_indices = @transform_11, window_bounds = array<i64: 1, 32>}, {pipeline_mode = #tpu.pipeline_mode<synchronous>, transform_indices = @transform_12, window_bounds = array<i64: 32, 4>}, {pipeline_mode = #tpu.pipeline_mode<synchronous>, transform_indices = @transform_13, window_bounds = array<i64: 1, 4>}, {pipeline_mode = #tpu.pipeline_mode<synchronous>, transform_indices = @transform_14, window_bounds = array<i64: 8, 128>}, {pipeline_mode = #tpu.pipeline_mode<synchronous>, transform_indices = @transform_15, window_bounds = array<i64: 128, 8>}, {pipeline_mode = #tpu.pipeline_mode<synchronous>, transform_indices = @transform_16, window_bounds = array<i64: 16, 128>}, {pipeline_mode = #tpu.pipeline_mode<synchronous>, transform_indices = @transform_17, window_bounds = array<i64: 128, 16>}, {pipeline_mode = #tpu.pipeline_mode<synchronous>, transform_indices = @transform_18, window_bounds = array<i64: 128, 64>}, {transform_indices = @transform_19, window_bounds = array<i64: 1, 16, 4>}]} {
    %c0 = arith.constant 0 : index
    %c0_0 = arith.constant 0 : index
    %c0_1 = arith.constant 0 : index
    %0 = vector.load %arg1[%c0, %c0_0, %c0_1] : memref<1x16x32xf32, #tpu.memory_space<vmem>>, vector<1x16x32xf32>
    %1 = vector.shape_cast %0 : vector<1x16x32xf32> to vector<16x32xf32>
    %c0_2 = arith.constant 0 : index
    %c0_3 = arith.constant 0 : index
    %c0_4 = arith.constant 0 : index
    %2 = vector.load %arg2[%c0_2, %c0_3, %c0_4] : memref<1x16x16xf32, #tpu.memory_space<vmem>>, vector<1x16x16xf32>
    %3 = vector.shape_cast %2 : vector<1x16x16xf32> to vector<16x16xf32>
    %c0_5 = arith.constant 0 : index
    %c0_6 = arith.constant 0 : index
    %4 = vector.load %arg15[%c0_5, %c0_6] : memref<8x128xf32, #tpu.memory_space<vmem>>, vector<8x128xf32>
    %c0_7 = arith.constant 0 : index
    %c0_8 = arith.constant 0 : index
    %5 = vector.load %arg16[%c0_7, %c0_8] : memref<128x8xf32, #tpu.memory_space<vmem>>, vector<128x8xf32>
    %c0_9 = arith.constant 0 : index
    %c0_10 = arith.constant 0 : index
    %6 = vector.load %arg17[%c0_9, %c0_10] : memref<16x128xf32, #tpu.memory_space<vmem>>, vector<16x128xf32>
    %c0_11 = arith.constant 0 : index
    %c0_12 = arith.constant 0 : index
    %7 = vector.load %arg18[%c0_11, %c0_12] : memref<128x16xf32, #tpu.memory_space<vmem>>, vector<128x16xf32>
    %c0_13 = arith.constant 0 : index
    %c0_14 = arith.constant 0 : index
    %8 = vector.load %arg19[%c0_13, %c0_14] : memref<128x64xf32, #tpu.memory_space<vmem>>, vector<128x64xf32>
    %cst = arith.constant dense<0.000000e+00> : vector<16x128xf32>
    %9 = tpu.matmul %3, %6, %cst {dimension_numbers = #tpu.dot_dimension_numbers<[1], [0], [0], [1], [0, 0, 1, 1], [], []>} : vector<16x16xf32>, vector<16x128xf32>, vector<16x128xf32> -> vector<16x128xf32>
    %c0_15 = arith.constant 0 : index
    %c0_16 = arith.constant 0 : index
    %10 = vector.load %arg3[%c0_15, %c0_16] : memref<32x64xf32, #tpu.memory_space<vmem>>, vector<32x64xf32>
    %cst_17 = arith.constant dense<0.000000e+00> : vector<16x64xf32>
    %11 = tpu.matmul %1, %10, %cst_17 {dimension_numbers = #tpu.dot_dimension_numbers<[1], [0], [0], [1], [0, 0, 1, 1], [], []>} : vector<16x32xf32>, vector<32x64xf32>, vector<16x64xf32> -> vector<16x64xf32>
    %c0_18 = arith.constant 0 : index
    %c0_19 = arith.constant 0 : index
    %12 = vector.load %arg4[%c0_18, %c0_19] : memref<1x64xf32, #tpu.memory_space<vmem>>, vector<1x64xf32>
    %13 = vector.broadcast %12 : vector<1x64xf32> to vector<16x64xf32>
    %14 = arith.addf %11, %13 : vector<16x64xf32>
    %cst_20 = arith.constant 0.000000e+00 : f32
    %15 = vector.broadcast %cst_20 : f32 to vector<16x64xf32>
    %16 = arith.maximumf %14, %15 : vector<16x64xf32>
    %c0_21 = arith.constant 0 : index
    %c0_22 = arith.constant 0 : index
    %c0_23 = arith.constant 0 : index
    %17 = vector.load %arg5[%c0_21, %c0_22, %c0_23] : memref<3x64x64xf32, #tpu.memory_space<vmem>>, vector<1x64x64xf32>
    %18 = vector.shape_cast %17 : vector<1x64x64xf32> to vector<64x64xf32>
    %cst_24 = arith.constant dense<0.000000e+00> : vector<16x64xf32>
    %19 = tpu.matmul %16, %18, %cst_24 {dimension_numbers = #tpu.dot_dimension_numbers<[1], [0], [0], [1], [0, 0, 1, 1], [], []>} : vector<16x64xf32>, vector<64x64xf32>, vector<16x64xf32> -> vector<16x64xf32>
    %c0_25 = arith.constant 0 : index
    %c0_26 = arith.constant 0 : index
    %c0_27 = arith.constant 0 : index
    %20 = vector.load %arg7[%c0_25, %c0_26, %c0_27] : memref<3x64x8xf32, #tpu.memory_space<vmem>>, vector<1x64x8xf32>
    %21 = vector.shape_cast %20 : vector<1x64x8xf32> to vector<64x8xf32>
    %cst_28 = arith.constant dense<0.000000e+00> : vector<16x8xf32>
    %22 = tpu.matmul %19, %21, %cst_28 {dimension_numbers = #tpu.dot_dimension_numbers<[1], [0], [0], [1], [0, 0, 1, 1], [], []>} : vector<16x64xf32>, vector<64x8xf32>, vector<16x8xf32> -> vector<16x8xf32>
    %c0_29 = arith.constant 0 : index
    %c0_30 = arith.constant 0 : index
    %c0_31 = arith.constant 0 : index
    %23 = vector.load %arg6[%c0_29, %c0_30, %c0_31] : memref<3x64x8xf32, #tpu.memory_space<vmem>>, vector<1x64x8xf32>
    %24 = vector.shape_cast %23 : vector<1x64x8xf32> to vector<64x8xf32>
    %cst_32 = arith.constant dense<0.000000e+00> : vector<16x8xf32>
    %25 = tpu.matmul %19, %24, %cst_32 {dimension_numbers = #tpu.dot_dimension_numbers<[1], [0], [0], [1], [0, 0, 1, 1], [], []>} : vector<16x64xf32>, vector<64x8xf32>, vector<16x8xf32> -> vector<16x8xf32>
    %cst_33 = arith.constant dense<0.000000e+00> : vector<16x128xf32>
    %26 = tpu.matmul %22, %4, %cst_33 {dimension_numbers = #tpu.dot_dimension_numbers<[1], [0], [0], [1], [0, 0, 1, 1], [], []>} : vector<16x8xf32>, vector<8x128xf32>, vector<16x128xf32> -> vector<16x128xf32>
    %cst_34 = arith.constant dense<0.000000e+00> : vector<16x128xf32>
    %27 = tpu.matmul %25, %4, %cst_34 {dimension_numbers = #tpu.dot_dimension_numbers<[1], [0], [0], [1], [0, 0, 1, 1], [], []>} : vector<16x8xf32>, vector<8x128xf32>, vector<16x128xf32> -> vector<16x128xf32>
    %28 = arith.mulf %27, %6 : vector<16x128xf32>
    %cst_35 = arith.constant dense<0.000000e+00> : vector<128xf32>
    %29 = vector.multi_reduction <add>, %28, %cst_35 [0] : vector<16x128xf32> to vector<128xf32>
    %30 = vector.shape_cast %29 : vector<128xf32> to vector<1x128xf32>
    %31 = vector.broadcast %30 : vector<1x128xf32> to vector<16x128xf32>
    %32 = arith.addf %26, %31 : vector<16x128xf32>
    %cst_36 = arith.constant 0.000000e+00 : f32
    %33 = vector.broadcast %cst_36 : f32 to vector<16x128xf32>
    %34 = arith.cmpf ogt, %32, %33 : vector<16x128xf32>
    %cst_37 = arith.constant 2.000000e-01 : f32
    %35 = vector.broadcast %cst_37 : f32 to vector<16x128xf32>
    %36 = arith.mulf %35, %32 : vector<16x128xf32>
    %37 = arith.select %34, %32, %36 : vector<16x128xi1>, vector<16x128xf32>
    %38 = arith.addf %37, %9 : vector<16x128xf32>
    %cst_38 = arith.constant dense<0xFF800000> : vector<16xf32>
    %39 = vector.multi_reduction <maximumf>, %38, %cst_38 [1] : vector<16x128xf32> to vector<16xf32>
    %40 = vector.shape_cast %39 : vector<16xf32> to vector<16x1xf32>
    %41 = vector.broadcast %40 : vector<16x1xf32> to vector<16x128xf32>
    %42 = arith.subf %38, %41 : vector<16x128xf32>
    %43 = math.exp %42 : vector<16x128xf32>
    %cst_39 = arith.constant dense<0.000000e+00> : vector<16x8xf32>
    %44 = tpu.matmul %43, %5, %cst_39 {dimension_numbers = #tpu.dot_dimension_numbers<[1], [0], [0], [1], [0, 0, 1, 1], [], []>} : vector<16x128xf32>, vector<128x8xf32>, vector<16x8xf32> -> vector<16x8xf32>
    %45 = tpu.reciprocal %44 {approx = true} : vector<16x8xf32> -> vector<16x8xf32>
    %cst_40 = arith.constant dense<0.000000e+00> : vector<16x128xf32>
    %46 = tpu.matmul %45, %4, %cst_40 {dimension_numbers = #tpu.dot_dimension_numbers<[1], [0], [0], [1], [0, 0, 1, 1], [], []>} : vector<16x8xf32>, vector<8x128xf32>, vector<16x128xf32> -> vector<16x128xf32>
    %47 = arith.mulf %43, %46 : vector<16x128xf32>
    %cst_41 = arith.constant dense<0.000000e+00> : vector<128x64xf32>
    %48 = tpu.matmul %7, %19, %cst_41 {dimension_numbers = #tpu.dot_dimension_numbers<[1], [0], [0], [1], [0, 0, 1, 1], [], []>} : vector<128x16xf32>, vector<16x64xf32>, vector<128x64xf32> -> vector<128x64xf32>
    %49 = arith.mulf %48, %8 : vector<128x64xf32>
    %cst_42 = arith.constant dense<0.000000e+00> : vector<16x64xf32>
    %50 = tpu.matmul %47, %49, %cst_42 {dimension_numbers = #tpu.dot_dimension_numbers<[1], [0], [0], [1], [0, 0, 1, 1], [], []>} : vector<16x128xf32>, vector<128x64xf32>, vector<16x64xf32> -> vector<16x64xf32>
    %c0_43 = arith.constant 0 : index
    %c0_44 = arith.constant 0 : index
    %c0_45 = arith.constant 0 : index
    %51 = vector.load %arg8[%c0_43, %c0_44, %c0_45] : memref<3x1x64xf32, #tpu.memory_space<vmem>>, vector<1x1x64xf32>
    %52 = vector.shape_cast %51 : vector<1x1x64xf32> to vector<1x64xf32>
    %53 = vector.broadcast %52 : vector<1x64xf32> to vector<16x64xf32>
    %54 = arith.addf %50, %53 : vector<16x64xf32>
    %55 = arith.addf %54, %16 : vector<16x64xf32>
    %cst_46 = arith.constant dense<0.000000e+00> : vector<16xf32>
    %56 = vector.multi_reduction <add>, %55, %cst_46 [1] : vector<16x64xf32> to vector<16xf32>
    %57 = vector.shape_cast %56 : vector<16xf32> to vector<16x1xf32>
    %cst_47 = arith.constant 6.400000e+01 : f32
    %58 = vector.broadcast %cst_47 : f32 to vector<16x1xf32>
    %59 = arith.divf %57, %58 : vector<16x1xf32>
    %60 = vector.broadcast %59 : vector<16x1xf32> to vector<16x64xf32>
    %61 = arith.subf %55, %60 : vector<16x64xf32>
    %62 = arith.mulf %61, %61 : vector<16x64xf32>
    %cst_48 = arith.constant dense<0.000000e+00> : vector<16xf32>
    %63 = vector.multi_reduction <add>, %62, %cst_48 [1] : vector<16x64xf32> to vector<16xf32>
    %64 = vector.shape_cast %63 : vector<16xf32> to vector<16x1xf32>
    %cst_49 = arith.constant 6.400000e+01 : f32
    %65 = vector.broadcast %cst_49 : f32 to vector<16x1xf32>
    %66 = arith.divf %64, %65 : vector<16x1xf32>
    %67 = vector.broadcast %59 : vector<16x1xf32> to vector<16x64xf32>
    %68 = arith.subf %55, %67 : vector<16x64xf32>
    %cst_50 = arith.constant 9.99999974E-6 : f32
    %69 = vector.broadcast %cst_50 : f32 to vector<16x1xf32>
    %70 = arith.addf %66, %69 : vector<16x1xf32>
    %71 = math.sqrt %70 : vector<16x1xf32>
    %72 = vector.broadcast %71 : vector<16x1xf32> to vector<16x64xf32>
    %73 = arith.divf %68, %72 : vector<16x64xf32>
    %c0_51 = arith.constant 0 : index
    %c0_52 = arith.constant 0 : index
    %c0_53 = arith.constant 0 : index
    %74 = vector.load %arg9[%c0_51, %c0_52, %c0_53] : memref<3x1x64xf32, #tpu.memory_space<vmem>>, vector<1x1x64xf32>
    %75 = vector.shape_cast %74 : vector<1x1x64xf32> to vector<1x64xf32>
    %76 = vector.broadcast %75 : vector<1x64xf32> to vector<16x64xf32>
    %77 = arith.mulf %73, %76 : vector<16x64xf32>
    %c0_54 = arith.constant 0 : index
    %c0_55 = arith.constant 0 : index
    %c0_56 = arith.constant 0 : index
    %78 = vector.load %arg10[%c0_54, %c0_55, %c0_56] : memref<3x1x64xf32, #tpu.memory_space<vmem>>, vector<1x1x64xf32>
    %79 = vector.shape_cast %78 : vector<1x1x64xf32> to vector<1x64xf32>
    %80 = vector.broadcast %79 : vector<1x64xf32> to vector<16x64xf32>
    %81 = arith.addf %77, %80 : vector<16x64xf32>
    %cst_57 = arith.constant 0.000000e+00 : f32
    %82 = vector.broadcast %cst_57 : f32 to vector<16x64xf32>
    %83 = arith.maximumf %81, %82 : vector<16x64xf32>
    %c1 = arith.constant 1 : index
    %c0_58 = arith.constant 0 : index
    %c0_59 = arith.constant 0 : index
    %84 = vector.load %arg5[%c1, %c0_58, %c0_59] : memref<3x64x64xf32, #tpu.memory_space<vmem>>, vector<1x64x64xf32>
    %85 = vector.shape_cast %84 : vector<1x64x64xf32> to vector<64x64xf32>
    %cst_60 = arith.constant dense<0.000000e+00> : vector<16x64xf32>
    %86 = tpu.matmul %83, %85, %cst_60 {dimension_numbers = #tpu.dot_dimension_numbers<[1], [0], [0], [1], [0, 0, 1, 1], [], []>} : vector<16x64xf32>, vector<64x64xf32>, vector<16x64xf32> -> vector<16x64xf32>
    %c1_61 = arith.constant 1 : index
    %c0_62 = arith.constant 0 : index
    %c0_63 = arith.constant 0 : index
    %87 = vector.load %arg7[%c1_61, %c0_62, %c0_63] : memref<3x64x8xf32, #tpu.memory_space<vmem>>, vector<1x64x8xf32>
    %88 = vector.shape_cast %87 : vector<1x64x8xf32> to vector<64x8xf32>
    %cst_64 = arith.constant dense<0.000000e+00> : vector<16x8xf32>
    %89 = tpu.matmul %86, %88, %cst_64 {dimension_numbers = #tpu.dot_dimension_numbers<[1], [0], [0], [1], [0, 0, 1, 1], [], []>} : vector<16x64xf32>, vector<64x8xf32>, vector<16x8xf32> -> vector<16x8xf32>
    %c1_65 = arith.constant 1 : index
    %c0_66 = arith.constant 0 : index
    %c0_67 = arith.constant 0 : index
    %90 = vector.load %arg6[%c1_65, %c0_66, %c0_67] : memref<3x64x8xf32, #tpu.memory_space<vmem>>, vector<1x64x8xf32>
    %91 = vector.shape_cast %90 : vector<1x64x8xf32> to vector<64x8xf32>
    %cst_68 = arith.constant dense<0.000000e+00> : vector<16x8xf32>
    %92 = tpu.matmul %86, %91, %cst_68 {dimension_numbers = #tpu.dot_dimension_numbers<[1], [0], [0], [1], [0, 0, 1, 1], [], []>} : vector<16x64xf32>, vector<64x8xf32>, vector<16x8xf32> -> vector<16x8xf32>
    %cst_69 = arith.constant dense<0.000000e+00> : vector<16x128xf32>
    %93 = tpu.matmul %89, %4, %cst_69 {dimension_numbers = #tpu.dot_dimension_numbers<[1], [0], [0], [1], [0, 0, 1, 1], [], []>} : vector<16x8xf32>, vector<8x128xf32>, vector<16x128xf32> -> vector<16x128xf32>
    %cst_70 = arith.constant dense<0.000000e+00> : vector<16x128xf32>
    %94 = tpu.matmul %92, %4, %cst_70 {dimension_numbers = #tpu.dot_dimension_numbers<[1], [0], [0], [1], [0, 0, 1, 1], [], []>} : vector<16x8xf32>, vector<8x128xf32>, vector<16x128xf32> -> vector<16x128xf32>
    %95 = arith.mulf %94, %6 : vector<16x128xf32>
    %cst_71 = arith.constant dense<0.000000e+00> : vector<128xf32>
    %96 = vector.multi_reduction <add>, %95, %cst_71 [0] : vector<16x128xf32> to vector<128xf32>
    %97 = vector.shape_cast %96 : vector<128xf32> to vector<1x128xf32>
    %98 = vector.broadcast %97 : vector<1x128xf32> to vector<16x128xf32>
    %99 = arith.addf %93, %98 : vector<16x128xf32>
    %cst_72 = arith.constant 0.000000e+00 : f32
    %100 = vector.broadcast %cst_72 : f32 to vector<16x128xf32>
    %101 = arith.cmpf ogt, %99, %100 : vector<16x128xf32>
    %cst_73 = arith.constant 2.000000e-01 : f32
    %102 = vector.broadcast %cst_73 : f32 to vector<16x128xf32>
    %103 = arith.mulf %102, %99 : vector<16x128xf32>
    %104 = arith.select %101, %99, %103 : vector<16x128xi1>, vector<16x128xf32>
    %105 = arith.addf %104, %9 : vector<16x128xf32>
    %cst_74 = arith.constant dense<0xFF800000> : vector<16xf32>
    %106 = vector.multi_reduction <maximumf>, %105, %cst_74 [1] : vector<16x128xf32> to vector<16xf32>
    %107 = vector.shape_cast %106 : vector<16xf32> to vector<16x1xf32>
    %108 = vector.broadcast %107 : vector<16x1xf32> to vector<16x128xf32>
    %109 = arith.subf %105, %108 : vector<16x128xf32>
    %110 = math.exp %109 : vector<16x128xf32>
    %cst_75 = arith.constant dense<0.000000e+00> : vector<16x8xf32>
    %111 = tpu.matmul %110, %5, %cst_75 {dimension_numbers = #tpu.dot_dimension_numbers<[1], [0], [0], [1], [0, 0, 1, 1], [], []>} : vector<16x128xf32>, vector<128x8xf32>, vector<16x8xf32> -> vector<16x8xf32>
    %112 = tpu.reciprocal %111 {approx = true} : vector<16x8xf32> -> vector<16x8xf32>
    %cst_76 = arith.constant dense<0.000000e+00> : vector<16x128xf32>
    %113 = tpu.matmul %112, %4, %cst_76 {dimension_numbers = #tpu.dot_dimension_numbers<[1], [0], [0], [1], [0, 0, 1, 1], [], []>} : vector<16x8xf32>, vector<8x128xf32>, vector<16x128xf32> -> vector<16x128xf32>
    %114 = arith.mulf %110, %113 : vector<16x128xf32>
    %cst_77 = arith.constant dense<0.000000e+00> : vector<128x64xf32>
    %115 = tpu.matmul %7, %86, %cst_77 {dimension_numbers = #tpu.dot_dimension_numbers<[1], [0], [0], [1], [0, 0, 1, 1], [], []>} : vector<128x16xf32>, vector<16x64xf32>, vector<128x64xf32> -> vector<128x64xf32>
    %116 = arith.mulf %115, %8 : vector<128x64xf32>
    %cst_78 = arith.constant dense<0.000000e+00> : vector<16x64xf32>
    %117 = tpu.matmul %114, %116, %cst_78 {dimension_numbers = #tpu.dot_dimension_numbers<[1], [0], [0], [1], [0, 0, 1, 1], [], []>} : vector<16x128xf32>, vector<128x64xf32>, vector<16x64xf32> -> vector<16x64xf32>
    %c1_79 = arith.constant 1 : index
    %c0_80 = arith.constant 0 : index
    %c0_81 = arith.constant 0 : index
    %118 = vector.load %arg8[%c1_79, %c0_80, %c0_81] : memref<3x1x64xf32, #tpu.memory_space<vmem>>, vector<1x1x64xf32>
    %119 = vector.shape_cast %118 : vector<1x1x64xf32> to vector<1x64xf32>
    %120 = vector.broadcast %119 : vector<1x64xf32> to vector<16x64xf32>
    %121 = arith.addf %117, %120 : vector<16x64xf32>
    %122 = arith.addf %121, %83 : vector<16x64xf32>
    %cst_82 = arith.constant dense<0.000000e+00> : vector<16xf32>
    %123 = vector.multi_reduction <add>, %122, %cst_82 [1] : vector<16x64xf32> to vector<16xf32>
    %124 = vector.shape_cast %123 : vector<16xf32> to vector<16x1xf32>
    %cst_83 = arith.constant 6.400000e+01 : f32
    %125 = vector.broadcast %cst_83 : f32 to vector<16x1xf32>
    %126 = arith.divf %124, %125 : vector<16x1xf32>
    %127 = vector.broadcast %126 : vector<16x1xf32> to vector<16x64xf32>
    %128 = arith.subf %122, %127 : vector<16x64xf32>
    %129 = arith.mulf %128, %128 : vector<16x64xf32>
    %cst_84 = arith.constant dense<0.000000e+00> : vector<16xf32>
    %130 = vector.multi_reduction <add>, %129, %cst_84 [1] : vector<16x64xf32> to vector<16xf32>
    %131 = vector.shape_cast %130 : vector<16xf32> to vector<16x1xf32>
    %cst_85 = arith.constant 6.400000e+01 : f32
    %132 = vector.broadcast %cst_85 : f32 to vector<16x1xf32>
    %133 = arith.divf %131, %132 : vector<16x1xf32>
    %134 = vector.broadcast %126 : vector<16x1xf32> to vector<16x64xf32>
    %135 = arith.subf %122, %134 : vector<16x64xf32>
    %cst_86 = arith.constant 9.99999974E-6 : f32
    %136 = vector.broadcast %cst_86 : f32 to vector<16x1xf32>
    %137 = arith.addf %133, %136 : vector<16x1xf32>
    %138 = math.sqrt %137 : vector<16x1xf32>
    %139 = vector.broadcast %138 : vector<16x1xf32> to vector<16x64xf32>
    %140 = arith.divf %135, %139 : vector<16x64xf32>
    %c1_87 = arith.constant 1 : index
    %c0_88 = arith.constant 0 : index
    %c0_89 = arith.constant 0 : index
    %141 = vector.load %arg9[%c1_87, %c0_88, %c0_89] : memref<3x1x64xf32, #tpu.memory_space<vmem>>, vector<1x1x64xf32>
    %142 = vector.shape_cast %141 : vector<1x1x64xf32> to vector<1x64xf32>
    %143 = vector.broadcast %142 : vector<1x64xf32> to vector<16x64xf32>
    %144 = arith.mulf %140, %143 : vector<16x64xf32>
    %c1_90 = arith.constant 1 : index
    %c0_91 = arith.constant 0 : index
    %c0_92 = arith.constant 0 : index
    %145 = vector.load %arg10[%c1_90, %c0_91, %c0_92] : memref<3x1x64xf32, #tpu.memory_space<vmem>>, vector<1x1x64xf32>
    %146 = vector.shape_cast %145 : vector<1x1x64xf32> to vector<1x64xf32>
    %147 = vector.broadcast %146 : vector<1x64xf32> to vector<16x64xf32>
    %148 = arith.addf %144, %147 : vector<16x64xf32>
    %cst_93 = arith.constant 0.000000e+00 : f32
    %149 = vector.broadcast %cst_93 : f32 to vector<16x64xf32>
    %150 = arith.maximumf %148, %149 : vector<16x64xf32>
    %c2 = arith.constant 2 : index
    %c0_94 = arith.constant 0 : index
    %c0_95 = arith.constant 0 : index
    %151 = vector.load %arg5[%c2, %c0_94, %c0_95] : memref<3x64x64xf32, #tpu.memory_space<vmem>>, vector<1x64x64xf32>
    %152 = vector.shape_cast %151 : vector<1x64x64xf32> to vector<64x64xf32>
    %cst_96 = arith.constant dense<0.000000e+00> : vector<16x64xf32>
    %153 = tpu.matmul %150, %152, %cst_96 {dimension_numbers = #tpu.dot_dimension_numbers<[1], [0], [0], [1], [0, 0, 1, 1], [], []>} : vector<16x64xf32>, vector<64x64xf32>, vector<16x64xf32> -> vector<16x64xf32>
    %c2_97 = arith.constant 2 : index
    %c0_98 = arith.constant 0 : index
    %c0_99 = arith.constant 0 : index
    %154 = vector.load %arg7[%c2_97, %c0_98, %c0_99] : memref<3x64x8xf32, #tpu.memory_space<vmem>>, vector<1x64x8xf32>
    %155 = vector.shape_cast %154 : vector<1x64x8xf32> to vector<64x8xf32>
    %cst_100 = arith.constant dense<0.000000e+00> : vector<16x8xf32>
    %156 = tpu.matmul %153, %155, %cst_100 {dimension_numbers = #tpu.dot_dimension_numbers<[1], [0], [0], [1], [0, 0, 1, 1], [], []>} : vector<16x64xf32>, vector<64x8xf32>, vector<16x8xf32> -> vector<16x8xf32>
    %c2_101 = arith.constant 2 : index
    %c0_102 = arith.constant 0 : index
    %c0_103 = arith.constant 0 : index
    %157 = vector.load %arg6[%c2_101, %c0_102, %c0_103] : memref<3x64x8xf32, #tpu.memory_space<vmem>>, vector<1x64x8xf32>
    %158 = vector.shape_cast %157 : vector<1x64x8xf32> to vector<64x8xf32>
    %cst_104 = arith.constant dense<0.000000e+00> : vector<16x8xf32>
    %159 = tpu.matmul %153, %158, %cst_104 {dimension_numbers = #tpu.dot_dimension_numbers<[1], [0], [0], [1], [0, 0, 1, 1], [], []>} : vector<16x64xf32>, vector<64x8xf32>, vector<16x8xf32> -> vector<16x8xf32>
    %cst_105 = arith.constant dense<0.000000e+00> : vector<16x128xf32>
    %160 = tpu.matmul %156, %4, %cst_105 {dimension_numbers = #tpu.dot_dimension_numbers<[1], [0], [0], [1], [0, 0, 1, 1], [], []>} : vector<16x8xf32>, vector<8x128xf32>, vector<16x128xf32> -> vector<16x128xf32>
    %cst_106 = arith.constant dense<0.000000e+00> : vector<16x128xf32>
    %161 = tpu.matmul %159, %4, %cst_106 {dimension_numbers = #tpu.dot_dimension_numbers<[1], [0], [0], [1], [0, 0, 1, 1], [], []>} : vector<16x8xf32>, vector<8x128xf32>, vector<16x128xf32> -> vector<16x128xf32>
    %162 = arith.mulf %161, %6 : vector<16x128xf32>
    %cst_107 = arith.constant dense<0.000000e+00> : vector<128xf32>
    %163 = vector.multi_reduction <add>, %162, %cst_107 [0] : vector<16x128xf32> to vector<128xf32>
    %164 = vector.shape_cast %163 : vector<128xf32> to vector<1x128xf32>
    %165 = vector.broadcast %164 : vector<1x128xf32> to vector<16x128xf32>
    %166 = arith.addf %160, %165 : vector<16x128xf32>
    %cst_108 = arith.constant 0.000000e+00 : f32
    %167 = vector.broadcast %cst_108 : f32 to vector<16x128xf32>
    %168 = arith.cmpf ogt, %166, %167 : vector<16x128xf32>
    %cst_109 = arith.constant 2.000000e-01 : f32
    %169 = vector.broadcast %cst_109 : f32 to vector<16x128xf32>
    %170 = arith.mulf %169, %166 : vector<16x128xf32>
    %171 = arith.select %168, %166, %170 : vector<16x128xi1>, vector<16x128xf32>
    %172 = arith.addf %171, %9 : vector<16x128xf32>
    %cst_110 = arith.constant dense<0xFF800000> : vector<16xf32>
    %173 = vector.multi_reduction <maximumf>, %172, %cst_110 [1] : vector<16x128xf32> to vector<16xf32>
    %174 = vector.shape_cast %173 : vector<16xf32> to vector<16x1xf32>
    %175 = vector.broadcast %174 : vector<16x1xf32> to vector<16x128xf32>
    %176 = arith.subf %172, %175 : vector<16x128xf32>
    %177 = math.exp %176 : vector<16x128xf32>
    %cst_111 = arith.constant dense<0.000000e+00> : vector<16x8xf32>
    %178 = tpu.matmul %177, %5, %cst_111 {dimension_numbers = #tpu.dot_dimension_numbers<[1], [0], [0], [1], [0, 0, 1, 1], [], []>} : vector<16x128xf32>, vector<128x8xf32>, vector<16x8xf32> -> vector<16x8xf32>
    %179 = tpu.reciprocal %178 {approx = true} : vector<16x8xf32> -> vector<16x8xf32>
    %cst_112 = arith.constant dense<0.000000e+00> : vector<16x128xf32>
    %180 = tpu.matmul %179, %4, %cst_112 {dimension_numbers = #tpu.dot_dimension_numbers<[1], [0], [0], [1], [0, 0, 1, 1], [], []>} : vector<16x8xf32>, vector<8x128xf32>, vector<16x128xf32> -> vector<16x128xf32>
    %181 = arith.mulf %177, %180 : vector<16x128xf32>
    %cst_113 = arith.constant dense<0.000000e+00> : vector<128x64xf32>
    %182 = tpu.matmul %7, %153, %cst_113 {dimension_numbers = #tpu.dot_dimension_numbers<[1], [0], [0], [1], [0, 0, 1, 1], [], []>} : vector<128x16xf32>, vector<16x64xf32>, vector<128x64xf32> -> vector<128x64xf32>
    %183 = arith.mulf %182, %8 : vector<128x64xf32>
    %cst_114 = arith.constant dense<0.000000e+00> : vector<16x64xf32>
    %184 = tpu.matmul %181, %183, %cst_114 {dimension_numbers = #tpu.dot_dimension_numbers<[1], [0], [0], [1], [0, 0, 1, 1], [], []>} : vector<16x128xf32>, vector<128x64xf32>, vector<16x64xf32> -> vector<16x64xf32>
    %c2_115 = arith.constant 2 : index
    %c0_116 = arith.constant 0 : index
    %c0_117 = arith.constant 0 : index
    %185 = vector.load %arg8[%c2_115, %c0_116, %c0_117] : memref<3x1x64xf32, #tpu.memory_space<vmem>>, vector<1x1x64xf32>
    %186 = vector.shape_cast %185 : vector<1x1x64xf32> to vector<1x64xf32>
    %187 = vector.broadcast %186 : vector<1x64xf32> to vector<16x64xf32>
    %188 = arith.addf %184, %187 : vector<16x64xf32>
    %189 = arith.addf %188, %150 : vector<16x64xf32>
    %cst_118 = arith.constant dense<0.000000e+00> : vector<16xf32>
    %190 = vector.multi_reduction <add>, %189, %cst_118 [1] : vector<16x64xf32> to vector<16xf32>
    %191 = vector.shape_cast %190 : vector<16xf32> to vector<16x1xf32>
    %cst_119 = arith.constant 6.400000e+01 : f32
    %192 = vector.broadcast %cst_119 : f32 to vector<16x1xf32>
    %193 = arith.divf %191, %192 : vector<16x1xf32>
    %194 = vector.broadcast %193 : vector<16x1xf32> to vector<16x64xf32>
    %195 = arith.subf %189, %194 : vector<16x64xf32>
    %196 = arith.mulf %195, %195 : vector<16x64xf32>
    %cst_120 = arith.constant dense<0.000000e+00> : vector<16xf32>
    %197 = vector.multi_reduction <add>, %196, %cst_120 [1] : vector<16x64xf32> to vector<16xf32>
    %198 = vector.shape_cast %197 : vector<16xf32> to vector<16x1xf32>
    %cst_121 = arith.constant 6.400000e+01 : f32
    %199 = vector.broadcast %cst_121 : f32 to vector<16x1xf32>
    %200 = arith.divf %198, %199 : vector<16x1xf32>
    %201 = vector.broadcast %193 : vector<16x1xf32> to vector<16x64xf32>
    %202 = arith.subf %189, %201 : vector<16x64xf32>
    %cst_122 = arith.constant 9.99999974E-6 : f32
    %203 = vector.broadcast %cst_122 : f32 to vector<16x1xf32>
    %204 = arith.addf %200, %203 : vector<16x1xf32>
    %205 = math.sqrt %204 : vector<16x1xf32>
    %206 = vector.broadcast %205 : vector<16x1xf32> to vector<16x64xf32>
    %207 = arith.divf %202, %206 : vector<16x64xf32>
    %c2_123 = arith.constant 2 : index
    %c0_124 = arith.constant 0 : index
    %c0_125 = arith.constant 0 : index
    %208 = vector.load %arg9[%c2_123, %c0_124, %c0_125] : memref<3x1x64xf32, #tpu.memory_space<vmem>>, vector<1x1x64xf32>
    %209 = vector.shape_cast %208 : vector<1x1x64xf32> to vector<1x64xf32>
    %210 = vector.broadcast %209 : vector<1x64xf32> to vector<16x64xf32>
    %211 = arith.mulf %207, %210 : vector<16x64xf32>
    %c2_126 = arith.constant 2 : index
    %c0_127 = arith.constant 0 : index
    %c0_128 = arith.constant 0 : index
    %212 = vector.load %arg10[%c2_126, %c0_127, %c0_128] : memref<3x1x64xf32, #tpu.memory_space<vmem>>, vector<1x1x64xf32>
    %213 = vector.shape_cast %212 : vector<1x1x64xf32> to vector<1x64xf32>
    %214 = vector.broadcast %213 : vector<1x64xf32> to vector<16x64xf32>
    %215 = arith.addf %211, %214 : vector<16x64xf32>
    %cst_129 = arith.constant 0.000000e+00 : f32
    %216 = vector.broadcast %cst_129 : f32 to vector<16x64xf32>
    %217 = arith.maximumf %215, %216 : vector<16x64xf32>
    %c0_130 = arith.constant 0 : index
    %c0_131 = arith.constant 0 : index
    %218 = vector.load %arg11[%c0_130, %c0_131] : memref<64x32xf32, #tpu.memory_space<vmem>>, vector<64x32xf32>
    %cst_132 = arith.constant dense<0.000000e+00> : vector<16x32xf32>
    %219 = tpu.matmul %217, %218, %cst_132 {dimension_numbers = #tpu.dot_dimension_numbers<[1], [0], [0], [1], [0, 0, 1, 1], [], []>} : vector<16x64xf32>, vector<64x32xf32>, vector<16x32xf32> -> vector<16x32xf32>
    %c0_133 = arith.constant 0 : index
    %c0_134 = arith.constant 0 : index
    %220 = vector.load %arg12[%c0_133, %c0_134] : memref<1x32xf32, #tpu.memory_space<vmem>>, vector<1x32xf32>
    %221 = vector.broadcast %220 : vector<1x32xf32> to vector<16x32xf32>
    %222 = arith.addf %219, %221 : vector<16x32xf32>
    %cst_135 = arith.constant 0.000000e+00 : f32
    %223 = vector.broadcast %cst_135 : f32 to vector<16x32xf32>
    %224 = arith.maximumf %222, %223 : vector<16x32xf32>
    %c0_136 = arith.constant 0 : index
    %c0_137 = arith.constant 0 : index
    %225 = vector.load %arg13[%c0_136, %c0_137] : memref<32x4xf32, #tpu.memory_space<vmem>>, vector<32x4xf32>
    %cst_138 = arith.constant dense<0.000000e+00> : vector<16x4xf32>
    %226 = tpu.matmul %224, %225, %cst_138 {dimension_numbers = #tpu.dot_dimension_numbers<[1], [0], [0], [1], [0, 0, 1, 1], [], []>} : vector<16x32xf32>, vector<32x4xf32>, vector<16x4xf32> -> vector<16x4xf32>
    %c0_139 = arith.constant 0 : index
    %c0_140 = arith.constant 0 : index
    %227 = vector.load %arg14[%c0_139, %c0_140] : memref<1x4xf32, #tpu.memory_space<vmem>>, vector<1x4xf32>
    %228 = vector.broadcast %227 : vector<1x4xf32> to vector<16x4xf32>
    %229 = arith.addf %226, %228 : vector<16x4xf32>
    %cst_141 = arith.constant dense<0xFF800000> : vector<16xf32>
    %230 = vector.multi_reduction <maximumf>, %229, %cst_141 [1] : vector<16x4xf32> to vector<16xf32>
    %231 = vector.shape_cast %230 : vector<16xf32> to vector<16x1xf32>
    %232 = vector.broadcast %231 : vector<16x1xf32> to vector<16x4xf32>
    %233 = arith.subf %229, %232 : vector<16x4xf32>
    %234 = math.exp %233 : vector<16x4xf32>
    %cst_142 = arith.constant dense<0.000000e+00> : vector<16xf32>
    %235 = vector.multi_reduction <add>, %234, %cst_142 [1] : vector<16x4xf32> to vector<16xf32>
    %236 = vector.shape_cast %235 : vector<16xf32> to vector<16x1xf32>
    %237 = math.log %236 : vector<16x1xf32>
    %238 = arith.addf %237, %231 : vector<16x1xf32>
    %239 = vector.broadcast %238 : vector<16x1xf32> to vector<16x4xf32>
    %240 = arith.subf %229, %239 : vector<16x4xf32>
    %c0_143 = arith.constant 0 : index
    %c0_144 = arith.constant 0 : index
    %c0_145 = arith.constant 0 : index
    %241 = vector.load %arg20[%c0_143, %c0_144, %c0_145] : memref<1x16x4xf32, #tpu.memory_space<vmem>>, vector<1x16x4xf32>
    %242 = vector.shape_cast %241 : vector<1x16x4xf32> to vector<16x4xf32>
    %243 = vector.shape_cast %240 : vector<16x4xf32> to vector<1x16x4xf32>
    tpu.vector_store %arg20[%c0_143, %c0_144, %c0_145], %243 {strides = array<i32>} : memref<1x16x4xf32, #tpu.memory_space<vmem>>, vector<1x16x4xf32>,
    return
  }
  func.func @transform_0(%arg0: i32) -> (i32, i32, i32) {
    %c0_i32 = arith.constant 0 : i32
    %c0_i32_0 = arith.constant 0 : i32
    %c0_i32_1 = arith.constant 0 : i32
    return %arg0, %c0_i32, %c0_i32_0 : i32, i32, i32
  }
  func.func @transform_1(%arg0: i32) -> (i32, i32, i32) {
    %c0_i32 = arith.constant 0 : i32
    %c0_i32_0 = arith.constant 0 : i32
    %c0_i32_1 = arith.constant 0 : i32
    return %arg0, %c0_i32, %c0_i32_0 : i32, i32, i32
  }
  func.func @transform_2(%arg0: i32) -> (i32, i32) {
    %c0_i32 = arith.constant 0 : i32
    %c0_i32_0 = arith.constant 0 : i32
    %c0_i32_1 = arith.constant 0 : i32
    return %c0_i32, %c0_i32_0 : i32, i32
  }
  func.func @transform_3(%arg0: i32) -> (i32, i32) {
    %c0_i32 = arith.constant 0 : i32
    %c0_i32_0 = arith.constant 0 : i32
    %c0_i32_1 = arith.constant 0 : i32
    return %c0_i32, %c0_i32_0 : i32, i32
  }
  func.func @transform_4(%arg0: i32) -> (i32, i32, i32) {
    %c0_i32 = arith.constant 0 : i32
    %c0_i32_0 = arith.constant 0 : i32
    %c0_i32_1 = arith.constant 0 : i32
    %c0_i32_2 = arith.constant 0 : i32
    return %c0_i32, %c0_i32_0, %c0_i32_1 : i32, i32, i32
  }
  func.func @transform_5(%arg0: i32) -> (i32, i32, i32) {
    %c0_i32 = arith.constant 0 : i32
    %c0_i32_0 = arith.constant 0 : i32
    %c0_i32_1 = arith.constant 0 : i32
    %c0_i32_2 = arith.constant 0 : i32
    return %c0_i32, %c0_i32_0, %c0_i32_1 : i32, i32, i32
  }
  func.func @transform_6(%arg0: i32) -> (i32, i32, i32) {
    %c0_i32 = arith.constant 0 : i32
    %c0_i32_0 = arith.constant 0 : i32
    %c0_i32_1 = arith.constant 0 : i32
    %c0_i32_2 = arith.constant 0 : i32
    return %c0_i32, %c0_i32_0, %c0_i32_1 : i32, i32, i32
  }
  func.func @transform_7(%arg0: i32) -> (i32, i32, i32) {
    %c0_i32 = arith.constant 0 : i32
    %c0_i32_0 = arith.constant 0 : i32
    %c0_i32_1 = arith.constant 0 : i32
    %c0_i32_2 = arith.constant 0 : i32
    return %c0_i32, %c0_i32_0, %c0_i32_1 : i32, i32, i32
  }
  func.func @transform_8(%arg0: i32) -> (i32, i32, i32) {
    %c0_i32 = arith.constant 0 : i32
    %c0_i32_0 = arith.constant 0 : i32
    %c0_i32_1 = arith.constant 0 : i32
    %c0_i32_2 = arith.constant 0 : i32
    return %c0_i32, %c0_i32_0, %c0_i32_1 : i32, i32, i32
  }
  func.func @transform_9(%arg0: i32) -> (i32, i32, i32) {
    %c0_i32 = arith.constant 0 : i32
    %c0_i32_0 = arith.constant 0 : i32
    %c0_i32_1 = arith.constant 0 : i32
    %c0_i32_2 = arith.constant 0 : i32
    return %c0_i32, %c0_i32_0, %c0_i32_1 : i32, i32, i32
  }
  func.func @transform_10(%arg0: i32) -> (i32, i32) {
    %c0_i32 = arith.constant 0 : i32
    %c0_i32_0 = arith.constant 0 : i32
    %c0_i32_1 = arith.constant 0 : i32
    return %c0_i32, %c0_i32_0 : i32, i32
  }
  func.func @transform_11(%arg0: i32) -> (i32, i32) {
    %c0_i32 = arith.constant 0 : i32
    %c0_i32_0 = arith.constant 0 : i32
    %c0_i32_1 = arith.constant 0 : i32
    return %c0_i32, %c0_i32_0 : i32, i32
  }
  func.func @transform_12(%arg0: i32) -> (i32, i32) {
    %c0_i32 = arith.constant 0 : i32
    %c0_i32_0 = arith.constant 0 : i32
    %c0_i32_1 = arith.constant 0 : i32
    return %c0_i32, %c0_i32_0 : i32, i32
  }
  func.func @transform_13(%arg0: i32) -> (i32, i32) {
    %c0_i32 = arith.constant 0 : i32
    %c0_i32_0 = arith.constant 0 : i32
    %c0_i32_1 = arith.constant 0 : i32
    return %c0_i32, %c0_i32_0 : i32, i32
  }
  func.func @transform_14(%arg0: i32) -> (i32, i32) {
    %c0_i32 = arith.constant 0 : i32
    %c0_i32_0 = arith.constant 0 : i32
    %c0_i32_1 = arith.constant 0 : i32
    return %c0_i32, %c0_i32_0 : i32, i32
  }
  func.func @transform_15(%arg0: i32) -> (i32, i32) {
    %c0_i32 = arith.constant 0 : i32
    %c0_i32_0 = arith.constant 0 : i32
    %c0_i32_1 = arith.constant 0 : i32
    return %c0_i32, %c0_i32_0 : i32, i32
  }
  func.func @transform_16(%arg0: i32) -> (i32, i32) {
    %c0_i32 = arith.constant 0 : i32
    %c0_i32_0 = arith.constant 0 : i32
    %c0_i32_1 = arith.constant 0 : i32
    return %c0_i32, %c0_i32_0 : i32, i32
  }
  func.func @transform_17(%arg0: i32) -> (i32, i32) {
    %c0_i32 = arith.constant 0 : i32
    %c0_i32_0 = arith.constant 0 : i32
    %c0_i32_1 = arith.constant 0 : i32
    return %c0_i32, %c0_i32_0 : i32, i32
  }
  func.func @transform_18(%arg0: i32) -> (i32, i32) {
    %c0_i32 = arith.constant 0 : i32
    %c0_i32_0 = arith.constant 0 : i32
    %c0_i32_1 = arith.constant 0 : i32
    return %c0_i32, %c0_i32_0 : i32, i32
  }
  func.func @transform_19(%arg0: i32) -> (i32, i32, i32) {
    %c0_i32 = arith.constant 0 : i32
    %c0_i32_0 = arith.constant 0 : i32
    %c0_i32_1 = arith.constant 0 : i32
    return %arg0, %c0_i32, %c0_i32_0 : i32, i32, i32
  }
}

</mosaic_0001>

<llo_original>
// kernel: tpu_custom_call.1
$region0: #{tpu_custom_call.1}
  #allocation0 [shape = 'u32[]', space=smem, size = 0x4, offset = 0x4, fixed_abs, tag = 'smem constant byte address 0x4 - core index']
  #allocation1 [shape = 'u32[72,128]{1,0:T(1,128)}', space=vmem, size = 0x9000, scoped, tag = 'internal scratch']
  %s0 = inlined_call_operand.vmem [shape: f32[4,16,32], index: 0, kind: input, shape index: {}]
  %s1 = inlined_call_operand.vmem [shape: f32[4,16,16], index: 1, kind: input, shape index: {}]
  %s2 = inlined_call_operand.vmem [shape: f32[32,64], index: 2, kind: input, shape index: {}]
  %s3 = inlined_call_operand.vmem [shape: f32[1,64], index: 3, kind: input, shape index: {}]
  %s4 = inlined_call_operand.vmem [shape: f32[3,64,64], index: 4, kind: input, shape index: {}]
  %s5 = inlined_call_operand.vmem [shape: f32[3,64,8], index: 5, kind: input, shape index: {}]
  %s6 = inlined_call_operand.vmem [shape: f32[3,64,8], index: 6, kind: input, shape index: {}]
  %s7 = inlined_call_operand.vmem [shape: f32[3,1,64], index: 7, kind: input, shape index: {}]
  %s8 = inlined_call_operand.vmem [shape: f32[3,1,64], index: 8, kind: input, shape index: {}]
  %s9 = inlined_call_operand.vmem [shape: f32[3,1,64], index: 9, kind: input, shape index: {}]
  %s10 = inlined_call_operand.vmem [shape: f32[64,32], index: 10, kind: input, shape index: {}]
  %s11 = inlined_call_operand.vmem [shape: f32[1,32], index: 11, kind: input, shape index: {}]
  %s12 = inlined_call_operand.vmem [shape: f32[32,4], index: 12, kind: input, shape index: {}]
  %s13 = inlined_call_operand.vmem [shape: f32[1,4], index: 13, kind: input, shape index: {}]
  %s14 = inlined_call_operand.vmem [shape: f32[8,128], index: 14, kind: input, shape index: {}]
  %s15 = inlined_call_operand.vmem [shape: f32[128,8], index: 15, kind: input, shape index: {}]
  %s16 = inlined_call_operand.vmem [shape: f32[16,128], index: 16, kind: input, shape index: {}]
  %s17 = inlined_call_operand.vmem [shape: f32[128,16], index: 17, kind: input, shape index: {}]
  %s18 = inlined_call_operand.vmem [shape: f32[128,64], index: 18, kind: input, shape index: {}]
  %s19 = inlined_call_operand.vmem [shape: f32[4,16,4], index: 19, kind: output, shape index: {}]
  %s20 = sld [smem:[#allocation0]]
  $region109: #{tpu_custom_call.1} parent=0
    _
  %s22 = ssub.s32 1, %s20
  %s23 = scalar_select 0, %s22, %s20
  loop: start=0, step=1, limit=6
  $region2: #{tpu_custom_call.1} parent=0 // loop_pre_header
    _
  $region3: #{tpu_custom_call.1} parent=0 // loop_header
    %s25 = sphi 0, %s29
    %p26 = scmp.ge.s32.totalorder %s25, 6
    %s35 = sphi 0, %s37
    %s38 = sphi 0, %s35
    %s39 = sphi 0, %s38
    %s55 = sphi 0, %s39
    %s61 = sphi 0, %s63
    %s64 = sphi 0, %s61
    %s65 = sphi 0, %s64
    %s81 = sphi 0, %s65
    %s85 = sphi 0, %s85
    %s87 = sphi 0, %s85
    %s88 = sphi 0, %s87
    %s102 = sphi 0, %s88
    %s106 = sphi 0, %s106
    %s108 = sphi 0, %s106
    %s109 = sphi 0, %s108
    %s123 = sphi 0, %s109
    %s127 = sphi 0, %s127
    %s129 = sphi 0, %s127
    %s130 = sphi 0, %s129
    %s144 = sphi 0, %s130
    %s148 = sphi 0, %s148
    %s150 = sphi 0, %s148
    %s151 = sphi 0, %s150
    %s165 = sphi 0, %s151
    %s169 = sphi 0, %s169
    %s171 = sphi 0, %s169
    %s172 = sphi 0, %s171
    %s186 = sphi 0, %s172
    %s190 = sphi 0, %s190
    %s192 = sphi 0, %s190
    %s193 = sphi 0, %s192
    %s207 = sphi 0, %s193
    %s211 = sphi 0, %s211
    %s213 = sphi 0, %s211
    %s214 = sphi 0, %s213
    %s228 = sphi 0, %s214
    %s232 = sphi 0, %s232
    %s234 = sphi 0, %s232
    %s235 = sphi 0, %s234
    %s249 = sphi 0, %s235
    %s253 = sphi 0, %s253
    %s255 = sphi 0, %s253
    %s256 = sphi 0, %s255
    %s270 = sphi 0, %s256
    %s274 = sphi 0, %s274
    %s276 = sphi 0, %s274
    %s277 = sphi 0, %s276
    %s291 = sphi 0, %s277
    %s295 = sphi 0, %s295
    %s297 = sphi 0, %s295
    %s298 = sphi 0, %s297
    %s312 = sphi 0, %s298
    %s316 = sphi 0, %s316
    %s318 = sphi 0, %s316
    %s319 = sphi 0, %s318
    %s333 = sphi 0, %s319
    %s337 = sphi 0, %s337
    %s339 = sphi 0, %s337
    %s340 = sphi 0, %s339
    %s354 = sphi 0, %s340
    %s358 = sphi 0, %s358
    %s360 = sphi 0, %s358
    %s361 = sphi 0, %s360
    %s375 = sphi 0, %s361
    %s379 = sphi 0, %s379
    %s381 = sphi 0, %s379
    %s382 = sphi 0, %s381
    %s396 = sphi 0, %s382
    %s400 = sphi 0, %s400
    %s402 = sphi 0, %s400
    %s403 = sphi 0, %s402
    %s417 = sphi 0, %s403
    %s421 = sphi 0, %s421
    %s423 = sphi 0, %s421
    %s424 = sphi 0, %s423
    %s438 = sphi 0, %s424
    %s444 = sphi 0, %s446
    %s447 = sphi 0, %s444
    %s448 = sphi 0, %s447
    %s464 = sphi 0, %s448
  $region4: #{tpu_custom_call.1} parent=0 // loop_header_branch
    %28 = sbr.rel (%p26) target = $region8
  $region5: #{tpu_custom_call.1} parent=0 // loop_body
    %s30 = ssub.s32 %s25, 1
    %s31 = ssub.s32 %s25, 2
    %s32 = sadd.s32 %s25, 1
    %s33 = ssub.s32 %s25, %s32
    %p34 = scmp.eq.s32.totalorder %s33, 0
    %s36 = sadd.s32 %s35, 1
    %s37 = scalar_select %p34, %s35, %s36
    %p40 = pneg %p34
    %p41 = scmp.eq.s32.totalorder %s25, 3
    %p42 = por %p40, %p41
    %p43 = scmp.ne.s32.totalorder %s35, %s38
    %p44 = scmp.eq.s32.totalorder %s25, 0
    %p45 = por %p43, %p44
    %p46 = scmp.ne.s32.totalorder %s35, %s38
    %p47 = scmp.eq.s32.totalorder %s30, 3
    %p48 = por %p46, %p47
    %p49 = scmp.ne.s32.totalorder %s38, %s39
    %p50 = scmp.eq.s32.totalorder %s30, 0
    %p51 = por %p49, %p50
    %p52 = scmp.ne.s32.totalorder %s38, %s39
    %p53 = scmp.eq.s32.totalorder %s31, 3
    %p54 = por %p52, %p53
    %p56 = scmp.ne.s32.totalorder %s39, %s55
    %p57 = scmp.eq.s32.totalorder %s31, 0
    %p58 = por %p56, %p57
    %s59 = ssub.s32 %s25, %s32
    %p60 = scmp.eq.s32.totalorder %s59, 0
    %s62 = sadd.s32 %s61, 1
    %s63 = scalar_select %p60, %s61, %s62
    %p66 = pneg %p60
    %p67 = scmp.eq.s32.totalorder %s25, 3
    %p68 = por %p66, %p67
    %p69 = scmp.ne.s32.totalorder %s61, %s64
    %p70 = scmp.eq.s32.totalorder %s25, 0
    %p71 = por %p69, %p70
    %p72 = scmp.ne.s32.totalorder %s61, %s64
    %p73 = scmp.eq.s32.totalorder %s30, 3
    %p74 = por %p72, %p73
    %p75 = scmp.ne.s32.totalorder %s64, %s65
    %p76 = scmp.eq.s32.totalorder %s30, 0
    %p77 = por %p75, %p76
    %p78 = scmp.ne.s32.totalorder %s64, %s65
    %p79 = scmp.eq.s32.totalorder %s31, 3
    %p80 = por %p78, %p79
    %p82 = scmp.ne.s32.totalorder %s65, %s81
    %p83 = scmp.eq.s32.totalorder %s31, 0
    %p84 = por %p82, %p83
    %s86 = sadd.s32 %s85, 1
    %p89 = scmp.eq.s32.totalorder %s25, 3
    %p90 = scmp.ne.s32.totalorder %s85, %s87
    %p91 = scmp.eq.s32.totalorder %s25, 0
    %p92 = por %p90, %p91
    %p93 = scmp.ne.s32.totalorder %s85, %s87
    %p94 = scmp.eq.s32.totalorder %s30, 3
    %p95 = por %p93, %p94
    %p96 = scmp.ne.s32.totalorder %s87, %s88
    %p97 = scmp.eq.s32.totalorder %s30, 0
    %p98 = por %p96, %p97
    %p99 = scmp.ne.s32.totalorder %s87, %s88
    %p100 = scmp.eq.s32.totalorder %s31, 3
    %p101 = por %p99, %p100
    %p103 = scmp.ne.s32.totalorder %s88, %s102
    %p104 = scmp.eq.s32.totalorder %s31, 0
    %p105 = por %p103, %p104
    %s107 = sadd.s32 %s106, 1
    %p110 = scmp.eq.s32.totalorder %s25, 3
    %p111 = scmp.ne.s32.totalorder %s106, %s108
    %p112 = scmp.eq.s32.totalorder %s25, 0
    %p113 = por %p111, %p112
    %p114 = scmp.ne.s32.totalorder %s106, %s108
    %p115 = scmp.eq.s32.totalorder %s30, 3
    %p116 = por %p114, %p115
    %p117 = scmp.ne.s32.totalorder %s108, %s109
    %p118 = scmp.eq.s32.totalorder %s30, 0
    %p119 = por %p117, %p118
    %p120 = scmp.ne.s32.totalorder %s108, %s109
    %p121 = scmp.eq.s32.totalorder %s31, 3
    %p122 = por %p120, %p121
    %p124 = scmp.ne.s32.totalorder %s109, %s123
    %p125 = scmp.eq.s32.totalorder %s31, 0
    %p126 = por %p124, %p125
    %s128 = sadd.s32 %s127, 1
    %p131 = scmp.eq.s32.totalorder %s25, 3
    %p132 = scmp.ne.s32.totalorder %s127, %s129
    %p133 = scmp.eq.s32.totalorder %s25, 0
    %p134 = por %p132, %p133
    %p135 = scmp.ne.s32.totalorder %s127, %s129
    %p136 = scmp.eq.s32.totalorder %s30, 3
    %p137 = por %p135, %p136
    %p138 = scmp.ne.s32.totalorder %s129, %s130
    %p139 = scmp.eq.s32.totalorder %s30, 0
    %p140 = por %p138, %p139
    %p141 = scmp.ne.s32.totalorder %s129, %s130
    %p142 = scmp.eq.s32.totalorder %s31, 3
    %p143 = por %p141, %p142
    %p145 = scmp.ne.s32.totalorder %s130, %s144
    %p146 = scmp.eq.s32.totalorder %s31, 0
    %p147 = por %p145, %p146
    %s149 = sadd.s32 %s148, 1
    %p152 = scmp.eq.s32.totalorder %s25, 3
    %p153 = scmp.ne.s32.totalorder %s148, %s150
    %p154 = scmp.eq.s32.totalorder %s25, 0
    %p155 = por %p153, %p154
    %p156 = scmp.ne.s32.totalorder %s148, %s150
    %p157 = scmp.eq.s32.totalorder %s30, 3
    %p158 = por %p156, %p157
    %p159 = scmp.ne.s32.totalorder %s150, %s151
    %p160 = scmp.eq.s32.totalorder %s30, 0
    %p161 = por %p159, %p160
    %p162 = scmp.ne.s32.totalorder %s150, %s151
    %p163 = scmp.eq.s32.totalorder %s31, 3
    %p164 = por %p162, %p163
    %p166 = scmp.ne.s32.totalorder %s151, %s165
    %p167 = scmp.eq.s32.totalorder %s31, 0
    %p168 = por %p166, %p167
    %s170 = sadd.s32 %s169, 1
    %p173 = scmp.eq.s32.totalorder %s25, 3
    %p174 = scmp.ne.s32.totalorder %s169, %s171
    %p175 = scmp.eq.s32.totalorder %s25, 0
    %p176 = por %p174, %p175
    %p177 = scmp.ne.s32.totalorder %s169, %s171
    %p178 = scmp.eq.s32.totalorder %s30, 3
    %p179 = por %p177, %p178
    %p180 = scmp.ne.s32.totalorder %s171, %s172
    %p181 = scmp.eq.s32.totalorder %s30, 0
    %p182 = por %p180, %p181
    %p183 = scmp.ne.s32.totalorder %s171, %s172
    %p184 = scmp.eq.s32.totalorder %s31, 3
    %p185 = por %p183, %p184
    %p187 = scmp.ne.s32.totalorder %s172, %s186
    %p188 = scmp.eq.s32.totalorder %s31, 0
    %p189 = por %p187, %p188
    %s191 = sadd.s32 %s190, 1
    %p194 = scmp.eq.s32.totalorder %s25, 3
    %p195 = scmp.ne.s32.totalorder %s190, %s192
    %p196 = scmp.eq.s32.totalorder %s25, 0
    %p197 = por %p195, %p196
    %p198 = scmp.ne.s32.totalorder %s190, %s192
    %p199 = scmp.eq.s32.totalorder %s30, 3
    %p200 = por %p198, %p199
    %p201 = scmp.ne.s32.totalorder %s192, %s193
    %p202 = scmp.eq.s32.totalorder %s30, 0
    %p203 = por %p201, %p202
    %p204 = scmp.ne.s32.totalorder %s192, %s193
    %p205 = scmp.eq.s32.totalorder %s31, 3
    %p206 = por %p204, %p205
    %p208 = scmp.ne.s32.totalorder %s193, %s207
    %p209 = scmp.eq.s32.totalorder %s31, 0
    %p210 = por %p208, %p209
    %s212 = sadd.s32 %s211, 1
    %p215 = scmp.eq.s32.totalorder %s25, 3
    %p216 = scmp.ne.s32.totalorder %s211, %s213
    %p217 = scmp.eq.s32.totalorder %s25, 0
    %p218 = por %p216, %p217
    %p219 = scmp.ne.s32.totalorder %s211, %s213
    %p220 = scmp.eq.s32.totalorder %s30, 3
    %p221 = por %p219, %p220
    %p222 = scmp.ne.s32.totalorder %s213, %s214
    %p223 = scmp.eq.s32.totalorder %s30, 0
    %p224 = por %p222, %p223
    %p225 = scmp.ne.s32.totalorder %s213, %s214
    %p226 = scmp.eq.s32.totalorder %s31, 3
    %p227 = por %p225, %p226
    %p229 = scmp.ne.s32.totalorder %s214, %s228
    %p230 = scmp.eq.s32.totalorder %s31, 0
    %p231 = por %p229, %p230
    %s233 = sadd.s32 %s232, 1
    %p236 = scmp.eq.s32.totalorder %s25, 3
    %p237 = scmp.ne.s32.totalorder %s232, %s234
    %p238 = scmp.eq.s32.totalorder %s25, 0
    %p239 = por %p237, %p238
    %p240 = scmp.ne.s32.totalorder %s232, %s234
    %p241 = scmp.eq.s32.totalorder %s30, 3
    %p242 = por %p240, %p241
    %p243 = scmp.ne.s32.totalorder %s234, %s235
    %p244 = scmp.eq.s32.totalorder %s30, 0
    %p245 = por %p243, %p244
    %p246 = scmp.ne.s32.totalorder %s234, %s235
    %p247 = scmp.eq.s32.totalorder %s31, 3
    %p248 = por %p246, %p247
    %p250 = scmp.ne.s32.totalorder %s235, %s249
    %p251 = scmp.eq.s32.totalorder %s31, 0
    %p252 = por %p250, %p251
    %s254 = sadd.s32 %s253, 1
    %p257 = scmp.eq.s32.totalorder %s25, 3
    %p258 = scmp.ne.s32.totalorder %s253, %s255
    %p259 = scmp.eq.s32.totalorder %s25, 0
    %p260 = por %p258, %p259
    %p261 = scmp.ne.s32.totalorder %s253, %s255
    %p262 = scmp.eq.s32.totalorder %s30, 3
    %p263 = por %p261, %p262
    %p264 = scmp.ne.s32.totalorder %s255, %s256
    %p265 = scmp.eq.s32.totalorder %s30, 0
    %p266 = por %p264, %p265
    %p267 = scmp.ne.s32.totalorder %s255, %s256
    %p268 = scmp.eq.s32.totalorder %s31, 3
    %p269 = por %p267, %p268
    %p271 = scmp.ne.s32.totalorder %s256, %s270
    %p272 = scmp.eq.s32.totalorder %s31, 0
    %p273 = por %p271, %p272
    %s275 = sadd.s32 %s274, 1
    %p278 = scmp.eq.s32.totalorder %s25, 3
    %p279 = scmp.ne.s32.totalorder %s274, %s276
    %p280 = scmp.eq.s32.totalorder %s25, 0
    %p281 = por %p279, %p280
    %p282 = scmp.ne.s32.totalorder %s274, %s276
    %p283 = scmp.eq.s32.totalorder %s30, 3
    %p284 = por %p282, %p283
    %p285 = scmp.ne.s32.totalorder %s276, %s277
    %p286 = scmp.eq.s32.totalorder %s30, 0
    %p287 = por %p285, %p286
    %p288 = scmp.ne.s32.totalorder %s276, %s277
    %p289 = scmp.eq.s32.totalorder %s31, 3
    %p290 = por %p288, %p289
    %p292 = scmp.ne.s32.totalorder %s277, %s291
    %p293 = scmp.eq.s32.totalorder %s31, 0
    %p294 = por %p292, %p293
    %s296 = sadd.s32 %s295, 1
    %p299 = scmp.eq.s32.totalorder %s25, 3
    %p300 = scmp.ne.s32.totalorder %s295, %s297
    %p301 = scmp.eq.s32.totalorder %s25, 0
    %p302 = por %p300, %p301
    %p303 = scmp.ne.s32.totalorder %s295, %s297
    %p304 = scmp.eq.s32.totalorder %s30, 3
    %p305 = por %p303, %p304
    %p306 = scmp.ne.s32.totalorder %s297, %s298
    %p307 = scmp.eq.s32.totalorder %s30, 0
    %p308 = por %p306, %p307
    %p309 = scmp.ne.s32.totalorder %s297, %s298
    %p310 = scmp.eq.s32.totalorder %s31, 3
    %p311 = por %p309, %p310
    %p313 = scmp.ne.s32.totalorder %s298, %s312
    %p314 = scmp.eq.s32.totalorder %s31, 0
    %p315 = por %p313, %p314
    %s317 = sadd.s32 %s316, 1
    %p320 = scmp.eq.s32.totalorder %s25, 3
    %p321 = scmp.ne.s32.totalorder %s316, %s318
    %p322 = scmp.eq.s32.totalorder %s25, 0
    %p323 = por %p321, %p322
    %p324 = scmp.ne.s32.totalorder %s316, %s318
    %p325 = scmp.eq.s32.totalorder %s30, 3
    %p326 = por %p324, %p325
    %p327 = scmp.ne.s32.totalorder %s318, %s319
    %p328 = scmp.eq.s32.totalorder %s30, 0
    %p329 = por %p327, %p328
    %p330 = scmp.ne.s32.totalorder %s318, %s319
    %p331 = scmp.eq.s32.totalorder %s31, 3
    %p332 = por %p330, %p331
    %p334 = scmp.ne.s32.totalorder %s319, %s333
    %p335 = scmp.eq.s32.totalorder %s31, 0
    %p336 = por %p334, %p335
    %s338 = sadd.s32 %s337, 1
    %p341 = scmp.eq.s32.totalorder %s25, 3
    %p342 = scmp.ne.s32.totalorder %s337, %s339
    %p343 = scmp.eq.s32.totalorder %s25, 0
    %p344 = por %p342, %p343
    %p345 = scmp.ne.s32.totalorder %s337, %s339
    %p346 = scmp.eq.s32.totalorder %s30, 3
    %p347 = por %p345, %p346
    %p348 = scmp.ne.s32.totalorder %s339, %s340
    %p349 = scmp.eq.s32.totalorder %s30, 0
    %p350 = por %p348, %p349
    %p351 = scmp.ne.s32.totalorder %s339, %s340
    %p352 = scmp.eq.s32.totalorder %s31, 3
    %p353 = por %p351, %p352
    %p355 = scmp.ne.s32.totalorder %s340, %s354
    %p356 = scmp.eq.s32.totalorder %s31, 0
    %p357 = por %p355, %p356
    %s359 = sadd.s32 %s358, 1
    %p362 = scmp.eq.s32.totalorder %s25, 3
    %p363 = scmp.ne.s32.totalorder %s358, %s360
    %p364 = scmp.eq.s32.totalorder %s25, 0
    %p365 = por %p363, %p364
    %p366 = scmp.ne.s32.totalorder %s358, %s360
    %p367 = scmp.eq.s32.totalorder %s30, 3
    %p368 = por %p366, %p367
    %p369 = scmp.ne.s32.totalorder %s360, %s361
    %p370 = scmp.eq.s32.totalorder %s30, 0
    %p371 = por %p369, %p370
    %p372 = scmp.ne.s32.totalorder %s360, %s361
    %p373 = scmp.eq.s32.totalorder %s31, 3
    %p374 = por %p372, %p373
    %p376 = scmp.ne.s32.totalorder %s361, %s375
    %p377 = scmp.eq.s32.totalorder %s31, 0
    %p378 = por %p376, %p377
    %s380 = sadd.s32 %s379, 1
    %p383 = scmp.eq.s32.totalorder %s25, 3
    %p384 = scmp.ne.s32.totalorder %s379, %s381
    %p385 = scmp.eq.s32.totalorder %s25, 0
    %p386 = por %p384, %p385
    %p387 = scmp.ne.s32.totalorder %s379, %s381
    %p388 = scmp.eq.s32.totalorder %s30, 3
    %p389 = por %p387, %p388
    %p390 = scmp.ne.s32.totalorder %s381, %s382
    %p391 = scmp.eq.s32.totalorder %s30, 0
    %p392 = por %p390, %p391
    %p393 = scmp.ne.s32.totalorder %s381, %s382
    %p394 = scmp.eq.s32.totalorder %s31, 3
    %p395 = por %p393, %p394
    %p397 = scmp.ne.s32.totalorder %s382, %s396
    %p398 = scmp.eq.s32.totalorder %s31, 0
    %p399 = por %p397, %p398
    %s401 = sadd.s32 %s400, 1
    %p404 = scmp.eq.s32.totalorder %s25, 3
    %p405 = scmp.ne.s32.totalorder %s400, %s402
    %p406 = scmp.eq.s32.totalorder %s25, 0
    %p407 = por %p405, %p406
    %p408 = scmp.ne.s32.totalorder %s400, %s402
    %p409 = scmp.eq.s32.totalorder %s30, 3
    %p410 = por %p408, %p409
    %p411 = scmp.ne.s32.totalorder %s402, %s403
    %p412 = scmp.eq.s32.totalorder %s30, 0
    %p413 = por %p411, %p412
    %p414 = scmp.ne.s32.totalorder %s402, %s403
    %p415 = scmp.eq.s32.totalorder %s31, 3
    %p416 = por %p414, %p415
    %p418 = scmp.ne.s32.totalorder %s403, %s417
    %p419 = scmp.eq.s32.totalorder %s31, 0
    %p420 = por %p418, %p419
    %s422 = sadd.s32 %s421, 1
    %p425 = scmp.eq.s32.totalorder %s25, 3
    %p426 = scmp.ne.s32.totalorder %s421, %s423
    %p427 = scmp.eq.s32.totalorder %s25, 0
    %p428 = por %p426, %p427
    %p429 = scmp.ne.s32.totalorder %s421, %s423
    %p430 = scmp.eq.s32.totalorder %s30, 3
    %p431 = por %p429, %p430
    %p432 = scmp.ne.s32.totalorder %s423, %s424
    %p433 = scmp.eq.s32.totalorder %s30, 0
    %p434 = por %p432, %p433
    %p435 = scmp.ne.s32.totalorder %s423, %s424
    %p436 = scmp.eq.s32.totalorder %s31, 3
    %p437 = por %p435, %p436
    %p439 = scmp.ne.s32.totalorder %s424, %s438
    %p440 = scmp.eq.s32.totalorder %s31, 0
    %p441 = por %p439, %p440
    %s442 = ssub.s32 %s25, %s32
    %p443 = scmp.eq.s32.totalorder %s442, 0
    %s445 = sadd.s32 %s444, 1
    %s446 = scalar_select %p443, %s444, %s445
    %p449 = pneg %p443
    %p450 = scmp.eq.s32.totalorder %s25, 3
    %p451 = por %p449, %p450
    %p452 = scmp.ne.s32.totalorder %s444, %s447
    %p453 = scmp.eq.s32.totalorder %s25, 0
    %p454 = por %p452, %p453
    %p455 = scmp.ne.s32.totalorder %s444, %s447
    %p456 = scmp.eq.s32.totalorder %s30, 3
    %p457 = por %p455, %p456
    %p458 = scmp.ne.s32.totalorder %s447, %s448
    %p459 = scmp.eq.s32.totalorder %s30, 0
    %p460 = por %p458, %p459
    %p461 = scmp.ne.s32.totalorder %s447, %s448
    %p462 = scmp.eq.s32.totalorder %s31, 3
    %p463 = por %p461, %p462
    %p465 = scmp.ne.s32.totalorder %s448, %s464
    %p466 = scmp.eq.s32.totalorder %s31, 0
    %p467 = por %p465, %p466
    %p468 = scmp.le.s32.totalorder 1, %s25
    %p469 = scmp.lt.s32.totalorder %s25, 5
    %p470 = pnand %p468, %p469
    %p471 = pneg %p470
    // Predicated region
    $region9: #{tpu_custom_call.1} parent=5 // pred_check
      _
    $region10: #{tpu_custom_call.1} parent=5 // pred_check_branch
      %473 = sbr.rel (%p470) target = $region12
    $region11: #{tpu_custom_call.1} parent=5 // pred_region
      %s474 = ssub.s32 %s25, 1
      // Predicated region
      $region13: #{tpu_custom_call.1} parent=11 // pred_check
        %p475 = pneg %p98
      $region14: #{tpu_custom_call.1} parent=11 // pred_check_branch
        %477 = sbr.rel (%p475) target = $region16
      $region15: #{tpu_custom_call.1} parent=11 // pred_region
        _
      $region16: #{tpu_custom_call.1} parent=11 // pred_fallthru
        _
      // Predicated region
      $region17: #{tpu_custom_call.1} parent=11 // pred_check
        %p478 = pneg %p119
      $region18: #{tpu_custom_call.1} parent=11 // pred_check_branch
        %480 = sbr.rel (%p478) target = $region20
      $region19: #{tpu_custom_call.1} parent=11 // pred_region
        _
      $region20: #{tpu_custom_call.1} parent=11 // pred_fallthru
        _
      // Predicated region
      $region21: #{tpu_custom_call.1} parent=11 // pred_check
        %p481 = pneg %p140
      $region22: #{tpu_custom_call.1} parent=11 // pred_check_branch
        %483 = sbr.rel (%p481) target = $region24
      $region23: #{tpu_custom_call.1} parent=11 // pred_region
        _
      $region24: #{tpu_custom_call.1} parent=11 // pred_fallthru
        _
      // Predicated region
      $region25: #{tpu_custom_call.1} parent=11 // pred_check
        %p484 = pneg %p161
      $region26: #{tpu_custom_call.1} parent=11 // pred_check_branch
        %486 = sbr.rel (%p484) target = $region28
      $region27: #{tpu_custom_call.1} parent=11 // pred_region
        _
      $region28: #{tpu_custom_call.1} parent=11 // pred_fallthru
        _
      // Predicated region
      $region29: #{tpu_custom_call.1} parent=11 // pred_check
        %p487 = pneg %p182
      $region30: #{tpu_custom_call.1} parent=11 // pred_check_branch
        %489 = sbr.rel (%p487) target = $region32
      $region31: #{tpu_custom_call.1} parent=11 // pred_region
        _
      $region32: #{tpu_custom_call.1} parent=11 // pred_fallthru
        _
      // Predicated region
      $region33: #{tpu_custom_call.1} parent=11 // pred_check
        %p490 = pneg %p203
      $region34: #{tpu_custom_call.1} parent=11 // pred_check_branch
        %492 = sbr.rel (%p490) target = $region36
      $region35: #{tpu_custom_call.1} parent=11 // pred_region
        _
      $region36: #{tpu_custom_call.1} parent=11 // pred_fallthru
        _
      // Predicated region
      $region37: #{tpu_custom_call.1} parent=11 // pred_check
        %p493 = pneg %p224
      $region38: #{tpu_custom_call.1} parent=11 // pred_check_branch
        %495 = sbr.rel (%p493) target = $region40
      $region39: #{tpu_custom_call.1} parent=11 // pred_region
        _
      $region40: #{tpu_custom_call.1} parent=11 // pred_fallthru
        _
      // Predicated region
      $region41: #{tpu_custom_call.1} parent=11 // pred_check
        %p496 = pneg %p245
      $region42: #{tpu_custom_call.1} parent=11 // pred_check_branch
        %498 = sbr.rel (%p496) target = $region44
      $region43: #{tpu_custom_call.1} parent=11 // pred_region
        _
      $region44: #{tpu_custom_call.1} parent=11 // pred_fallthru
        _
      // Predicated region
      $region45: #{tpu_custom_call.1} parent=11 // pred_check
        %p499 = pneg %p266
      $region46: #{tpu_custom_call.1} parent=11 // pred_check_branch
        %501 = sbr.rel (%p499) target = $region48
      $region47: #{tpu_custom_call.1} parent=11 // pred_region
        _
      $region48: #{tpu_custom_call.1} parent=11 // pred_fallthru
        _
      // Predicated region
      $region49: #{tpu_custom_call.1} parent=11 // pred_check
        %p502 = pneg %p287
      $region50: #{tpu_custom_call.1} parent=11 // pred_check_branch
        %504 = sbr.rel (%p502) target = $region52
      $region51: #{tpu_custom_call.1} parent=11 // pred_region
        _
      $region52: #{tpu_custom_call.1} parent=11 // pred_fallthru
        _
      // Predicated region
      $region53: #{tpu_custom_call.1} parent=11 // pred_check
        %p505 = pneg %p308
      $region54: #{tpu_custom_call.1} parent=11 // pred_check_branch
        %507 = sbr.rel (%p505) target = $region56
      $region55: #{tpu_custom_call.1} parent=11 // pred_region
        _
      $region56: #{tpu_custom_call.1} parent=11 // pred_fallthru
        _
      // Predicated region
      $region57: #{tpu_custom_call.1} parent=11 // pred_check
        %p508 = pneg %p329
      $region58: #{tpu_custom_call.1} parent=11 // pred_check_branch
        %510 = sbr.rel (%p508) target = $region60
      $region59: #{tpu_custom_call.1} parent=11 // pred_region
        _
      $region60: #{tpu_custom_call.1} parent=11 // pred_fallthru
        _
      // Predicated region
      $region61: #{tpu_custom_call.1} parent=11 // pred_check
        %p511 = pneg %p350
      $region62: #{tpu_custom_call.1} parent=11 // pred_check_branch
        %513 = sbr.rel (%p511) target = $region64
      $region63: #{tpu_custom_call.1} parent=11 // pred_region
        _
      $region64: #{tpu_custom_call.1} parent=11 // pred_fallthru
        _
      // Predicated region
      $region65: #{tpu_custom_call.1} parent=11 // pred_check
        %p514 = pneg %p371
      $region66: #{tpu_custom_call.1} parent=11 // pred_check_branch
        %516 = sbr.rel (%p514) target = $region68
      $region67: #{tpu_custom_call.1} parent=11 // pred_region
        _
      $region68: #{tpu_custom_call.1} parent=11 // pred_fallthru
        _
      // Predicated region
      $region69: #{tpu_custom_call.1} parent=11 // pred_check
        %p517 = pneg %p392
      $region70: #{tpu_custom_call.1} parent=11 // pred_check_branch
        %519 = sbr.rel (%p517) target = $region72
      $region71: #{tpu_custom_call.1} parent=11 // pred_region
        _
      $region72: #{tpu_custom_call.1} parent=11 // pred_fallthru
        _
      // Predicated region
      $region73: #{tpu_custom_call.1} parent=11 // pred_check
        %p520 = pneg %p413
      $region74: #{tpu_custom_call.1} parent=11 // pred_check_branch
        %522 = sbr.rel (%p520) target = $region76
      $region75: #{tpu_custom_call.1} parent=11 // pred_region
        _
      $region76: #{tpu_custom_call.1} parent=11 // pred_fallthru
        _
      // Predicated region
      $region77: #{tpu_custom_call.1} parent=11 // pred_check
        %p523 = pneg %p434
      $region78: #{tpu_custom_call.1} parent=11 // pred_check_branch
        %525 = sbr.rel (%p523) target = $region80
      $region79: #{tpu_custom_call.1} parent=11 // pred_region
        _
      $region80: #{tpu_custom_call.1} parent=11 // pred_fallthru
        _
    $region12: #{tpu_custom_call.1} parent=5 // pred_fallthru
      _
    %p526 = scmp.lt.s32.totalorder %s25, 4
    // Predicated region
    $region81: #{tpu_custom_call.1} parent=5 // pred_check
      %p527 = pneg %p526
    $region82: #{tpu_custom_call.1} parent=5 // pred_check_branch
      %529 = sbr.rel (%p527) target = $region84
    $region83: #{tpu_custom_call.1} parent=5 // pred_region
      // Predicated region
      $region85: #{tpu_custom_call.1} parent=83 // pred_check
        %p530 = pneg %p45
      $region86: #{tpu_custom_call.1} parent=83 // pred_check_branch
        %532 = sbr.rel (%p530) target = $region88
      $region87: #{tpu_custom_call.1} parent=83 // pred_region
        %p533 = scmp.lt.s32.totalorder %s25, 3
        %s534 = scalar_select %p533, %s25, 3
        %s535 = smul.addr %s534, 2
        %s536 = smul.addr %s535, 8
        %s537 = scalar_lea.vmem %s0, %s536
      $region88: #{tpu_custom_call.1} parent=83 // pred_fallthru
        _
      // Predicated region
      $region89: #{tpu_custom_call.1} parent=83 // pred_check
        %p538 = pneg %p71
      $region90: #{tpu_custom_call.1} parent=83 // pred_check_branch
        %540 = sbr.rel (%p538) target = $region92
      $region91: #{tpu_custom_call.1} parent=83 // pred_region
        %p541 = scmp.lt.s32.totalorder %s25, 3
        %s542 = scalar_select %p541, %s25, 3
        %s543 = smul.addr %s542, 2
        %s544 = smul.addr %s543, 8
        %s545 = scalar_lea.vmem %s1, %s544
      $region92: #{tpu_custom_call.1} parent=83 // pred_fallthru
        _
    $region84: #{tpu_custom_call.1} parent=5 // pred_fallthru
      _
    %p546 = scmp.le.s32.totalorder 1, %s25
    %p547 = scmp.lt.s32.totalorder %s25, 5
    %p548 = pnand %p546, %p547
    %p549 = pneg %p548
    // Predicated region
    $region93: #{tpu_custom_call.1} parent=5 // pred_check
      _
    $region94: #{tpu_custom_call.1} parent=5 // pred_check_branch
      %551 = sbr.rel (%p548) target = $region96
    $region95: #{tpu_custom_call.1} parent=5 // pred_region
      %s552 = ssub.s32 %s25, 1
      %p553 = scmp.lt.s32.totalorder %s30, 3
      %s554 = scalar_select %p553, %s30, 3
      %s555 = smul.addr %s554, 2
      %s556 = smul.addr %s555, 8
      %s557 = scalar_lea.vmem %s0, %s556
      %p558 = pneg %p51
      %p559 = pneg %p48
      %p560 = scmp.lt.s32.totalorder %s30, 3
      %s561 = scalar_select %p560, %s30, 3
      %s562 = smul.addr %s561, 2
      %s563 = smul.addr %s562, 8
      %s564 = scalar_lea.vmem %s1, %s563
      %p565 = pneg %p77
      %p566 = pneg %p74
      %p567 = pneg %p98
      %p568 = pneg %p95
      %p569 = pneg %p119
      %p570 = pneg %p116
      %p571 = pneg %p140
      %p572 = pneg %p137
      %p573 = pneg %p161
      %p574 = pneg %p158
      %p575 = pneg %p182
      %p576 = pneg %p179
      %p577 = pneg %p203
      %p578 = pneg %p200
      %p579 = pneg %p224
      %p580 = pneg %p221
      %p581 = pneg %p245
      %p582 = pneg %p242
      %p583 = pneg %p266
      %p584 = pneg %p263
      %p585 = pneg %p287
      %p586 = pneg %p284
      %p587 = pneg %p308
      %p588 = pneg %p305
      %p589 = pneg %p329
      %p590 = pneg %p326
      %p591 = pneg %p350
      %p592 = pneg %p347
      %p593 = pneg %p371
      %p594 = pneg %p368
      %p595 = pneg %p392
      %p596 = pneg %p389
      %p597 = pneg %p413
      %p598 = pneg %p410
      %p599 = pneg %p434
      %p600 = pneg %p431
      %p601 = pneg %p460
      %p602 = pneg %p457
      %p603 = scmp.lt.s32.totalorder %s30, 3
      %s604 = scalar_select %p603, %s30, 3
      %s605 = smul.addr %s604, 2
      %s606 = smul.addr %s605, 8
      %s607 = scalar_lea.vmem %s19, %s606
      %p608 = scmp.lt.s32.totalorder %s30, 3
      %s609 = scalar_select %p608, %s30, 3
      %s610 = smul.addr %s609, 2
      %s611 = smul.addr %s610, 8
      %s612 = scalar_lea.vmem %s0, %s611
      %p613 = scmp.lt.s32.totalorder %s30, 3
      %s614 = scalar_select %p613, %s30, 3
      %s615 = smul.addr %s614, 2
      %s616 = smul.addr %s615, 8
      %s617 = scalar_lea.vmem %s1, %s616
      %p618 = scmp.lt.s32.totalorder %s30, 3
      %s619 = scalar_select %p618, %s30, 3
      %s620 = smul.addr %s619, 2
      %s621 = smul.addr %s620, 8
      %s622 = scalar_lea.vmem %s19, %s621
      %v623 = vld [vmem:[%s612] sm:$0xff]
      %v624 = vld [vmem:[%s612 + $0x8] sm:$0xff]
      %v625 = vld [vmem:[%s617] sm:$0xff]
      %v626 = vld [vmem:[%s617 + $0x8] sm:$0xff]
      %v627 = vld [vmem:[%s14] sm:$0xff]
      %v628 = vld [vmem:[%s15] sm:$0xff]
      %v629 = vld [vmem:[%s15 + $0x8] sm:$0xff]
      %v630 = vld [vmem:[%s15 + $0x10] sm:$0xff]
      %v631 = vld [vmem:[%s15 + $0x18] sm:$0xff]
      %v632 = vld [vmem:[%s15 + $0x20] sm:$0xff]
      %v633 = vld [vmem:[%s15 + $0x28] sm:$0xff]
      %v634 = vld [vmem:[%s15 + $0x30] sm:$0xff]
      %v635 = vld [vmem:[%s15 + $0x38] sm:$0xff]
      %v636 = vld [vmem:[%s15 + $0x40] sm:$0xff]
      %v637 = vld [vmem:[%s15 + $0x48] sm:$0xff]
      %v638 = vld [vmem:[%s15 + $0x50] sm:$0xff]
      %v639 = vld [vmem:[%s15 + $0x58] sm:$0xff]
      %v640 = vld [vmem:[%s15 + $0x60] sm:$0xff]
      %v641 = vld [vmem:[%s15 + $0x68] sm:$0xff]
      %v642 = vld [vmem:[%s15 + $0x70] sm:$0xff]
      %v643 = vld [vmem:[%s15 + $0x78] sm:$0xff]
      %v644 = vld [vmem:[%s16] sm:$0xff]
      %v645 = vld [vmem:[%s16 + $0x8] sm:$0xff]
      %v646 = vld [vmem:[%s17] sm:$0xff]
      %v647 = vld [vmem:[%s17 + $0x8] sm:$0xff]
      %v648 = vld [vmem:[%s17 + $0x10] sm:$0xff]
      %v649 = vld [vmem:[%s17 + $0x18] sm:$0xff]
      %v650 = vld [vmem:[%s17 + $0x20] sm:$0xff]
      %v651 = vld [vmem:[%s17 + $0x28] sm:$0xff]
      %v652 = vld [vmem:[%s17 + $0x30] sm:$0xff]
      %v653 = vld [vmem:[%s17 + $0x38] sm:$0xff]
      %v654 = vld [vmem:[%s17 + $0x40] sm:$0xff]
      %v655 = vld [vmem:[%s17 + $0x48] sm:$0xff]
      %v656 = vld [vmem:[%s17 + $0x50] sm:$0xff]
      %v657 = vld [vmem:[%s17 + $0x58] sm:$0xff]
      %v658 = vld [vmem:[%s17 + $0x60] sm:$0xff]
      %v659 = vld [vmem:[%s17 + $0x68] sm:$0xff]
      %v660 = vld [vmem:[%s17 + $0x70] sm:$0xff]
      %v661 = vld [vmem:[%s17 + $0x78] sm:$0xff]
      %v662 = vld [vmem:[%s18] sm:$0xff]
      %v663 = vld [vmem:[%s18 + $0x8] sm:$0xff]
      %v664 = vld [vmem:[%s18 + $0x10] sm:$0xff]
      %v665 = vld [vmem:[%s18 + $0x18] sm:$0xff]
      %v666 = vld [vmem:[%s18 + $0x20] sm:$0xff]
      %v667 = vld [vmem:[%s18 + $0x28] sm:$0xff]
      %v668 = vld [vmem:[%s18 + $0x30] sm:$0xff]
      %v669 = vld [vmem:[%s18 + $0x38] sm:$0xff]
      %v670 = vld [vmem:[%s18 + $0x40] sm:$0xff]
      %v671 = vld [vmem:[%s18 + $0x48] sm:$0xff]
      %v672 = vld [vmem:[%s18 + $0x50] sm:$0xff]
      %v673 = vld [vmem:[%s18 + $0x58] sm:$0xff]
      %v674 = vld [vmem:[%s18 + $0x60] sm:$0xff]
      %v675 = vld [vmem:[%s18 + $0x68] sm:$0xff]
      %v676 = vld [vmem:[%s18 + $0x70] sm:$0xff]
      %v677 = vld [vmem:[%s18 + $0x78] sm:$0xff]
      %vm678 = vcmask 130048
      %v680 = vsel %vm678, %v625, 0
      %v683 = vsel %vm678, %v626, 0
      %685 = vmatpush.msra.mxu0 0.0
      %686 = vmatpush.msra.mxu0 0.0
      %687 = vmatpush.msra.mxu0 0.0
      %688 = vmatpush.msra.mxu0 0.0
      %689 = vmatpush.msra.mxu0 0.0
      %690 = vmatpush.msra.mxu0 0.0
      %691 = vmatpush.msra.mxu0 0.0
      %692 = vmatpush.msra.mxu0 0.0
      %693 = vmatpush.msra.mxu0 0.0
      %694 = vmatpush.msra.mxu0 0.0
      %695 = vmatpush.msra.mxu0 0.0
      %696 = vmatpush.msra.mxu0 0.0
      %697 = vmatpush.msra.mxu0 0.0
      %698 = vmatpush.msra.mxu0 0.0
      %699 = vmatpush.msra.mxu0 %v645
      %700 = vmatpush.msra.mxu0 %v644
      %701 = vmatmul.f32.gmra.mxu0 %v680
      %v702 = vpop.f32.mrf.mxu0
      %v703 = vadd.f32 0.0, %v702
      %704 = vmatmul.f32.gmra.mxu0 %v683
      %v705 = vpop.f32.mrf.mxu0
      %v706 = vadd.f32 0.0, %v705
      %707 = vdwg.mxu0
      %v708 = vld [vmem:[%s2] sm:$0xff]
      %v709 = vld [vmem:[%s2 + $0x8] sm:$0xff]
      %v710 = vld [vmem:[%s2 + $0x10] sm:$0xff]
      %v711 = vld [vmem:[%s2 + $0x18] sm:$0xff]
      %v712 = vld [vmem:[%s3] sm:$0x1]
      %v714 = vperm.slane %v712, 0
      %vm716 = vcmask 261120
      %v718 = vsel %vm716, %v623, 0
      %v721 = vsel %vm716, %v624, 0
      %723 = vmatpush.msra.mxu0 0.0
      %724 = vmatpush.msra.mxu0 0.0
      %725 = vmatpush.msra.mxu0 0.0
      %726 = vmatpush.msra.mxu0 0.0
      %727 = vmatpush.msra.mxu0 0.0
      %728 = vmatpush.msra.mxu0 0.0
      %729 = vmatpush.msra.mxu0 0.0
      %730 = vmatpush.msra.mxu0 0.0
      %731 = vmatpush.msra.mxu0 0.0
      %732 = vmatpush.msra.mxu0 0.0
      %733 = vmatpush.msra.mxu0 0.0
      %734 = vmatpush.msra.mxu0 0.0
      %735 = vmatpush.msra.mxu0 %v711
      %736 = vmatpush.msra.mxu0 %v710
      %737 = vmatpush.msra.mxu0 %v709
      %738 = vmatpush.msra.mxu0 %v708
      %739 = vmatmul.f32.gmra.mxu0 %v718
      %v740 = vpop.f32.mrf.mxu0
      %v741 = vadd.f32 %v714, %v740
      %742 = vmatmul.f32.gmra.mxu0 %v721
      %v743 = vpop.f32.mrf.mxu0
      %v744 = vadd.f32 %v714, %v743
      %745 = vdwg.mxu0
      %v746 = vmax.f32 %v741, 0.0
      %v747 = vmax.f32 %v744, 0.0
      %v748 = vld [vmem:[%s4] sm:$0xff]
      %v749 = vld [vmem:[%s4 + $0x8] sm:$0xff]
      %v750 = vld [vmem:[%s4 + $0x10] sm:$0xff]
      %v751 = vld [vmem:[%s4 + $0x18] sm:$0xff]
      %v752 = vld [vmem:[%s4 + $0x20] sm:$0xff]
      %v753 = vld [vmem:[%s4 + $0x28] sm:$0xff]
      %v754 = vld [vmem:[%s4 + $0x30] sm:$0xff]
      %v755 = vld [vmem:[%s4 + $0x38] sm:$0xff]
      %vm756 = vcmask 523264
      %v758 = vsel %vm756, %v746, 0
      %v761 = vsel %vm756, %v747, 0
      %763 = vmatpush.msra.mxu0 0.0
      %764 = vmatpush.msra.mxu0 0.0
      %765 = vmatpush.msra.mxu0 0.0
      %766 = vmatpush.msra.mxu0 0.0
      %767 = vmatpush.msra.mxu0 0.0
      %768 = vmatpush.msra.mxu0 0.0
      %769 = vmatpush.msra.mxu0 0.0
      %770 = vmatpush.msra.mxu0 0.0
      %771 = vmatpush.msra.mxu0 %v755
      %772 = vmatpush.msra.mxu0 %v754
      %773 = vmatpush.msra.mxu0 %v753
      %774 = vmatpush.msra.mxu0 %v752
      %775 = vmatpush.msra.mxu0 %v751
      %776 = vmatpush.msra.mxu0 %v750
      %777 = vmatpush.msra.mxu0 %v749
      %778 = vmatpush.msra.mxu0 %v748
      %779 = vmatmul.f32.gmra.mxu0 %v758
      %v780 = vpop.f32.mrf.mxu0
      %v781 = vadd.f32 0.0, %v780
      %782 = vmatmul.f32.gmra.mxu0 %v761
      %v783 = vpop.f32.mrf.mxu0
      %v784 = vadd.f32 0.0, %v783
      %785 = vdwg.mxu0
      %v786 = vld [vmem:[%s6] sm:$0xff]
      %v787 = vld [vmem:[%s6 + $0x8] sm:$0xff]
      %v788 = vld [vmem:[%s6 + $0x10] sm:$0xff]
      %v789 = vld [vmem:[%s6 + $0x18] sm:$0xff]
      %v790 = vld [vmem:[%s6 + $0x20] sm:$0xff]
      %v791 = vld [vmem:[%s6 + $0x28] sm:$0xff]
      %v792 = vld [vmem:[%s6 + $0x30] sm:$0xff]
      %v793 = vld [vmem:[%s6 + $0x38] sm:$0xff]
      %v795 = vsel %vm756, %v781, 0
      %v798 = vsel %vm756, %v784, 0
      %800 = vmatpush.msra.mxu0 0.0
      %801 = vmatpush.msra.mxu0 0.0
      %802 = vmatpush.msra.mxu0 0.0
      %803 = vmatpush.msra.mxu0 0.0
      %804 = vmatpush.msra.mxu0 0.0
      %805 = vmatpush.msra.mxu0 0.0
      %806 = vmatpush.msra.mxu0 0.0
      %807 = vmatpush.msra.mxu0 0.0
      %808 = vmatpush.msra.mxu0 %v793
      %809 = vmatpush.msra.mxu0 %v792
      %810 = vmatpush.msra.mxu0 %v791
      %811 = vmatpush.msra.mxu0 %v790
      %812 = vmatpush.msra.mxu0 %v789
      %813 = vmatpush.msra.mxu0 %v788
      %814 = vmatpush.msra.mxu0 %v787
      %815 = vmatpush.msra.mxu0 %v786
      %816 = vmatmul.f32.gmra.mxu0 %v795
      %v817 = vpop.f32.mrf.mxu0
      %v818 = vadd.f32 0.0, %v817
      %819 = vmatmul.f32.gmra.mxu0 %v798
      %v820 = vpop.f32.mrf.mxu0
      %v821 = vadd.f32 0.0, %v820
      %822 = vdwg.mxu0
      %v823 = vld [vmem:[%s5] sm:$0xff]
      %v824 = vld [vmem:[%s5 + $0x8] sm:$0xff]
      %v825 = vld [vmem:[%s5 + $0x10] sm:$0xff]
      %v826 = vld [vmem:[%s5 + $0x18] sm:$0xff]
      %v827 = vld [vmem:[%s5 + $0x20] sm:$0xff]
      %v828 = vld [vmem:[%s5 + $0x28] sm:$0xff]
      %v829 = vld [vmem:[%s5 + $0x30] sm:$0xff]
      %v830 = vld [vmem:[%s5 + $0x38] sm:$0xff]
      %831 = vmatpush.msra.mxu0 0.0
      %832 = vmatpush.msra.mxu0 0.0
      %833 = vmatpush.msra.mxu0 0.0
      %834 = vmatpush.msra.mxu0 0.0
      %835 = vmatpush.msra.mxu0 0.0
      %836 = vmatpush.msra.mxu0 0.0
      %837 = vmatpush.msra.mxu0 0.0
      %838 = vmatpush.msra.mxu0 0.0
      %839 = vmatpush.msra.mxu0 %v830
      %840 = vmatpush.msra.mxu0 %v829
      %841 = vmatpush.msra.mxu0 %v828
      %842 = vmatpush.msra.mxu0 %v827
      %843 = vmatpush.msra.mxu0 %v826
      %844 = vmatpush.msra.mxu0 %v825
      %845 = vmatpush.msra.mxu0 %v824
      %846 = vmatpush.msra.mxu0 %v823
      %847 = vmatmul.f32.gmra.mxu0 %v795
      %v848 = vpop.f32.mrf.mxu0
      %v849 = vadd.f32 0.0, %v848
      %850 = vmatmul.f32.gmra.mxu0 %v798
      %v851 = vpop.f32.mrf.mxu0
      %v852 = vadd.f32 0.0, %v851
      %853 = vdwg.mxu0
      %vm854 = vcmask 64512
      %v856 = vsel %vm854, %v849, 0
      %v859 = vsel %vm854, %v852, 0
      %861 = vmatpush.msra.mxu0 0.0
      %862 = vmatpush.msra.mxu0 0.0
      %863 = vmatpush.msra.mxu0 0.0
      %864 = vmatpush.msra.mxu0 0.0
      %865 = vmatpush.msra.mxu0 0.0
      %866 = vmatpush.msra.mxu0 0.0
      %867 = vmatpush.msra.mxu0 0.0
      %868 = vmatpush.msra.mxu0 0.0
      %869 = vmatpush.msra.mxu0 0.0
      %870 = vmatpush.msra.mxu0 0.0
      %871 = vmatpush.msra.mxu0 0.0
      %872 = vmatpush.msra.mxu0 0.0
      %873 = vmatpush.msra.mxu0 0.0
      %874 = vmatpush.msra.mxu0 0.0
      %875 = vmatpush.msra.mxu0 0.0
      %876 = vmatpush.msra.mxu0 %v627
      %877 = vmatmul.f32.gmra.mxu0 %v856
      %v878 = vpop.f32.mrf.mxu0
      %v879 = vadd.f32 0.0, %v878
      %880 = vmatmul.f32.gmra.mxu0 %v859
      %v881 = vpop.f32.mrf.mxu0
      %v882 = vadd.f32 0.0, %v881
      %883 = vdwg.mxu0
      %v884 = vmul.f32 %v879, %v644
      %v885 = vmul.f32 %v882, %v645
      %v886 = vadd.f32 %v884, %v885
      %v887 = vrot.slane %v886, 4
      %v888 = vadd.f32 %v886, %v887
      %v889 = vrot.slane %v888, 2
      %v890 = vadd.f32 %v888, %v889
      %v891 = vrot.slane %v890, 1
      %v892 = vadd.f32 %v890, %v891
      %v894 = vsel %vm854, %v818, 0
      %v897 = vsel %vm854, %v821, 0
      %899 = vmatpush.msra.mxu0 0.0
      %900 = vmatpush.msra.mxu0 0.0
      %901 = vmatpush.msra.mxu0 0.0
      %902 = vmatpush.msra.mxu0 0.0
      %903 = vmatpush.msra.mxu0 0.0
      %904 = vmatpush.msra.mxu0 0.0
      %905 = vmatpush.msra.mxu0 0.0
      %906 = vmatpush.msra.mxu0 0.0
      %907 = vmatpush.msra.mxu0 0.0
      %908 = vmatpush.msra.mxu0 0.0
      %909 = vmatpush.msra.mxu0 0.0
      %910 = vmatpush.msra.mxu0 0.0
      %911 = vmatpush.msra.mxu0 0.0
      %912 = vmatpush.msra.mxu0 0.0
      %913 = vmatpush.msra.mxu0 0.0
      %914 = vmatpush.msra.mxu0 %v627
      %915 = vmatmul.f32.gmra.mxu0 %v894
      %v916 = vpop.f32.mrf.mxu0
      %v917 = vadd.f32 %v892, %v916
      %918 = vmatmul.f32.gmra.mxu0 %v897
      %v919 = vpop.f32.mrf.mxu0
      %v920 = vadd.f32 %v892, %v919
      %921 = vdwg.mxu0
      %vm922 = vcmp.gt.f32.partialorder %v917, 0.0
      %vm923 = vcmp.gt.f32.partialorder %v920, 0.0
      %v924 = vmul.f32 %v917, 0.2
      %v925 = vmul.f32 %v920, 0.2
      %v926 = vsel %vm922, %v917, %v924
      %v927 = vsel %vm923, %v920, %v925
      %v928 = vadd.f32 %v926, %v703
      %v929 = vadd.f32 %v927, %v706
      %930 = vmax.xlane.f32.xlu0 %v928
      %v931 = vpop.xlane.xlu0 %930
      %932 = vmax.xlane.f32.xlu0 %v929
      %v933 = vpop.xlane.xlu0 %932
      %v934 = vsub.f32 %v928, %v931
      %v935 = vsub.f32 %v929, %v933
      %v936 = vmul.f32 %v934, 1.442695
      %v937 = vpow.pop %v936
      %v938 = vmul.f32 %v935, 1.442695
      %v939 = vpow.pop %v938
      %940 = vmatpush.msra.mxu0 %v643
      %941 = vmatpush.msra.mxu0 %v642
      %942 = vmatpush.msra.mxu0 %v641
      %943 = vmatpush.msra.mxu0 %v640
      %944 = vmatpush.msra.mxu0 %v639
      %945 = vmatpush.msra.mxu0 %v638
      %946 = vmatpush.msra.mxu0 %v637
      %947 = vmatpush.msra.mxu0 %v636
      %948 = vmatpush.msra.mxu0 %v635
      %949 = vmatpush.msra.mxu0 %v634
      %950 = vmatpush.msra.mxu0 %v633
      %951 = vmatpush.msra.mxu0 %v632
      %952 = vmatpush.msra.mxu0 %v631
      %953 = vmatpush.msra.mxu0 %v630
      %954 = vmatpush.msra.mxu0 %v629
      %955 = vmatpush.msra.mxu0 %v628
      %956 = vmatmul.f32.gmra.mxu0 %v937
      %v957 = vpop.f32.mrf.mxu0
      %v958 = vadd.f32 0.0, %v957
      %959 = vmatmul.f32.gmra.mxu0 %v939
      %v960 = vpop.f32.mrf.mxu0
      %v961 = vadd.f32 0.0, %v960
      %962 = vdwg.mxu0
      %v963 = vrcp.pop %v958
      %v964 = vrcp.pop %v961
      %v966 = vsel %vm854, %v963, 0
      %v969 = vsel %vm854, %v964, 0
      %971 = vmatpush.msra.mxu0 0.0
      %972 = vmatpush.msra.mxu0 0.0
      %973 = vmatpush.msra.mxu0 0.0
      %974 = vmatpush.msra.mxu0 0.0
      %975 = vmatpush.msra.mxu0 0.0
      %976 = vmatpush.msra.mxu0 0.0
      %977 = vmatpush.msra.mxu0 0.0
      %978 = vmatpush.msra.mxu0 0.0
      %979 = vmatpush.msra.mxu0 0.0
      %980 = vmatpush.msra.mxu0 0.0
      %981 = vmatpush.msra.mxu0 0.0
      %982 = vmatpush.msra.mxu0 0.0
      %983 = vmatpush.msra.mxu0 0.0
      %984 = vmatpush.msra.mxu0 0.0
      %985 = vmatpush.msra.mxu0 0.0
      %986 = vmatpush.msra.mxu0 %v627
      %987 = vmatmul.f32.gmra.mxu0 %v966
      %v988 = vpop.f32.mrf.mxu0
      %v989 = vadd.f32 0.0, %v988
      %990 = vmatmul.f32.gmra.mxu0 %v969
      %v991 = vpop.f32.mrf.mxu0
      %v992 = vadd.f32 0.0, %v991
      %993 = vdwg.mxu0
      %v994 = vmul.f32 %v937, %v989
      %v995 = vmul.f32 %v939, %v992
      %v997 = vsel %vm678, %v646, 0
      %v1000 = vsel %vm678, %v647, 0
      %v1003 = vsel %vm678, %v648, 0
      %v1006 = vsel %vm678, %v649, 0
      %v1009 = vsel %vm678, %v650, 0
      %v1012 = vsel %vm678, %v651, 0
      %v1015 = vsel %vm678, %v652, 0
      %v1018 = vsel %vm678, %v653, 0
      %v1021 = vsel %vm678, %v654, 0
      %v1024 = vsel %vm678, %v655, 0
      %v1027 = vsel %vm678, %v656, 0
      %v1030 = vsel %vm678, %v657, 0
      %v1033 = vsel %vm678, %v658, 0
      %v1036 = vsel %vm678, %v659, 0
      %v1039 = vsel %vm678, %v660, 0
      %v1042 = vsel %vm678, %v661, 0
      %1044 = vmatpush.msra.mxu0 0.0
      %1045 = vmatpush.msra.mxu0 0.0
      %1046 = vmatpush.msra.mxu0 0.0
      %1047 = vmatpush.msra.mxu0 0.0
      %1048 = vmatpush.msra.mxu0 0.0
      %1049 = vmatpush.msra.mxu0 0.0
      %1050 = vmatpush.msra.mxu0 0.0
      %1051 = vmatpush.msra.mxu0 0.0
      %1052 = vmatpush.msra.mxu0 0.0
      %1053 = vmatpush.msra.mxu0 0.0
      %1054 = vmatpush.msra.mxu0 0.0
      %1055 = vmatpush.msra.mxu0 0.0
      %1056 = vmatpush.msra.mxu0 0.0
      %1057 = vmatpush.msra.mxu0 0.0
      %1058 = vmatpush.msra.mxu0 %v784
      %1059 = vmatpush.msra.mxu0 %v781
      %1060 = vmatmul.f32.gmra.mxu0 %v997
      %v1061 = vpop.f32.mrf.mxu0
      %v1062 = vadd.f32 0.0, %v1061
      %1063 = vmatmul.f32.gmra.mxu0 %v1000
      %v1064 = vpop.f32.mrf.mxu0
      %v1065 = vadd.f32 0.0, %v1064
      %1066 = vmatmul.f32.gmra.mxu0 %v1003
      %v1067 = vpop.f32.mrf.mxu0
      %v1068 = vadd.f32 0.0, %v1067
      %1069 = vmatmul.f32.gmra.mxu0 %v1006
      %v1070 = vpop.f32.mrf.mxu0
      %v1071 = vadd.f32 0.0, %v1070
      %1072 = vmatmul.f32.gmra.mxu0 %v1009
      %v1073 = vpop.f32.mrf.mxu0
      %v1074 = vadd.f32 0.0, %v1073
      %1075 = vmatmul.f32.gmra.mxu0 %v1012
      %v1076 = vpop.f32.mrf.mxu0
      %v1077 = vadd.f32 0.0, %v1076
      %1078 = vmatmul.f32.gmra.mxu0 %v1015
      %v1079 = vpop.f32.mrf.mxu0
      %v1080 = vadd.f32 0.0, %v1079
      %1081 = vmatmul.f32.gmra.mxu0 %v1018
      %v1082 = vpop.f32.mrf.mxu0
      %v1083 = vadd.f32 0.0, %v1082
      %1084 = vmatmul.f32.gmra.mxu0 %v1021
      %v1085 = vpop.f32.mrf.mxu0
      %v1086 = vadd.f32 0.0, %v1085
      %1087 = vmatmul.f32.gmra.mxu0 %v1024
      %v1088 = vpop.f32.mrf.mxu0
      %v1089 = vadd.f32 0.0, %v1088
      %1090 = vmatmul.f32.gmra.mxu0 %v1027
      %v1091 = vpop.f32.mrf.mxu0
      %v1092 = vadd.f32 0.0, %v1091
      %1093 = vmatmul.f32.gmra.mxu0 %v1030
      %v1094 = vpop.f32.mrf.mxu0
      %v1095 = vadd.f32 0.0, %v1094
      %1096 = vmatmul.f32.gmra.mxu0 %v1033
      %v1097 = vpop.f32.mrf.mxu0
      %v1098 = vadd.f32 0.0, %v1097
      %1099 = vmatmul.f32.gmra.mxu0 %v1036
      %v1100 = vpop.f32.mrf.mxu0
      %v1101 = vadd.f32 0.0, %v1100
      %1102 = vmatmul.f32.gmra.mxu0 %v1039
      %v1103 = vpop.f32.mrf.mxu0
      %v1104 = vadd.f32 0.0, %v1103
      %1105 = vmatmul.f32.gmra.mxu0 %v1042
      %v1106 = vpop.f32.mrf.mxu0
      %v1107 = vadd.f32 0.0, %v1106
      %1108 = vdwg.mxu0
      %v1109 = vmul.f32 %v1062, %v662
      %v1110 = vmul.f32 %v1065, %v663
      %v1111 = vmul.f32 %v1068, %v664
      %v1112 = vmul.f32 %v1071, %v665
      %v1113 = vmul.f32 %v1074, %v666
      %v1114 = vmul.f32 %v1077, %v667
      %v1115 = vmul.f32 %v1080, %v668
      %v1116 = vmul.f32 %v1083, %v669
      %v1117 = vmul.f32 %v1086, %v670
      %v1118 = vmul.f32 %v1089, %v671
      %v1119 = vmul.f32 %v1092, %v672
      %v1120 = vmul.f32 %v1095, %v673
      %v1121 = vmul.f32 %v1098, %v674
      %v1122 = vmul.f32 %v1101, %v675
      %v1123 = vmul.f32 %v1104, %v676
      %v1124 = vmul.f32 %v1107, %v677
      %v1125 = vld [vmem:[%s7] sm:$0x1]
      %v1127 = vperm.slane %v1125, 0
      %1129 = vmatpush.msra.mxu0 %v1124
      %1130 = vmatpush.msra.mxu0 %v1123
      %1131 = vmatpush.msra.mxu0 %v1122
      %1132 = vmatpush.msra.mxu0 %v1121
      %1133 = vmatpush.msra.mxu0 %v1120
      %1134 = vmatpush.msra.mxu0 %v1119
      %1135 = vmatpush.msra.mxu0 %v1118
      %1136 = vmatpush.msra.mxu0 %v1117
      %1137 = vmatpush.msra.mxu0 %v1116
      %1138 = vmatpush.msra.mxu0 %v1115
      %1139 = vmatpush.msra.mxu0 %v1114
      %1140 = vmatpush.msra.mxu0 %v1113
      %1141 = vmatpush.msra.mxu0 %v1112
      %1142 = vmatpush.msra.mxu0 %v1111
      %1143 = vmatpush.msra.mxu0 %v1110
      %1144 = vmatpush.msra.mxu0 %v1109
      %1145 = vmatmul.f32.gmra.mxu0 %v994
      %v1146 = vpop.f32.mrf.mxu0
      %v1147 = vadd.f32 %v1127, %v1146
      %1148 = vmatmul.f32.gmra.mxu0 %v995
      %v1149 = vpop.f32.mrf.mxu0
      %v1150 = vadd.f32 %v1127, %v1149
      %1151 = vdwg.mxu0
      %v1152 = vadd.f32 %v1147, %v746
      %v1153 = vadd.f32 %v1150, %v747
      %v1154 = vsel %vm756, %v1152, 0.0
      %1155 = vadd.xlane.f32.xlu0 %v1154
      %v1156 = vpop.xlane.xlu0 %1155
      %v1157 = vsel %vm756, %v1153, 0.0
      %1158 = vadd.xlane.f32.xlu0 %v1157
      %v1159 = vpop.xlane.xlu0 %1158
      %v1160 = vrcp.pop 64.0
      %v1161 = vmul.f32 64.0, %v1160
      %v1162 = vsub.f32 1.0, %v1161
      %v1163 = vmul.f32 %v1160, %v1162
      %v1164 = vadd.f32 %v1160, %v1163
      %vm1165 = vweird.f32 %v1160
      %v1166 = vsel %vm1165, %v1160, %v1164
      %v1167 = vmul.f32 %v1156, %v1166
      %v1168 = vmul.f32 %v1159, %v1166
      %v1169 = vsub.f32 %v1152, %v1167
      %v1170 = vsub.f32 %v1153, %v1168
      %v1171 = vmul.f32 %v1169, %v1169
      %v1172 = vmul.f32 %v1170, %v1170
      %v1173 = vsel %vm756, %v1171, 0.0
      %1174 = vadd.xlane.f32.xlu0 %v1173
      %v1175 = vpop.xlane.xlu0 %1174
      %v1176 = vsel %vm756, %v1172, 0.0
      %1177 = vadd.xlane.f32.xlu0 %v1176
      %v1178 = vpop.xlane.xlu0 %1177
      %v1179 = vmul.f32 %v1175, %v1166
      %v1180 = vmul.f32 %v1178, %v1166
      %v1181 = vadd.f32 %v1179, 1e-05
      %v1182 = vadd.f32 %v1180, 1e-05
      %v1183 = vrsqrt.pop %v1181
      %v1184 = vmul.f32 %v1183, %v1181
      %v1185 = vmul.f32 %v1184, %v1183
      %v1186 = vmul.f32 0.5, %v1185
      %v1187 = vsub.f32 1.5, %v1186
      %v1188 = vmul.f32 %v1183, %v1187
      %v1189 = vmul.f32 %v1181, %v1188
      %vm1190 = vcmp.eq.f32.partialorder %v1181, inf
      %v1191 = vsel %vm1190, %v1181, %v1189
      %vm1192 = vcmp.eq.f32.partialorder %v1181, 0.0
      %v1193 = vand.u32 %v1181, 2147483648
      %v1194 = vsel %vm1192, %v1193, %v1191
      %v1195 = vrsqrt.pop %v1182
      %v1196 = vmul.f32 %v1195, %v1182
      %v1197 = vmul.f32 %v1196, %v1195
      %v1198 = vmul.f32 0.5, %v1197
      %v1199 = vsub.f32 1.5, %v1198
      %v1200 = vmul.f32 %v1195, %v1199
      %v1201 = vmul.f32 %v1182, %v1200
      %vm1202 = vcmp.eq.f32.partialorder %v1182, inf
      %v1203 = vsel %vm1202, %v1182, %v1201
      %vm1204 = vcmp.eq.f32.partialorder %v1182, 0.0
      %v1205 = vand.u32 %v1182, 2147483648
      %v1206 = vsel %vm1204, %v1205, %v1203
      %v1207 = vrcp.pop %v1194
      %v1208 = vmul.f32 %v1194, %v1207
      %v1209 = vsub.f32 1.0, %v1208
      %v1210 = vmul.f32 %v1207, %v1209
      %v1211 = vadd.f32 %v1207, %v1210
      %vm1212 = vweird.f32 %v1194
      %vm1213 = vweird.f32 %v1207
      %vm1214 = vmor %vm1212, %vm1213
      %v1215 = vsel %vm1214, %v1207, %v1211
      %v1216 = vand.u32 2147483647, %v1194
      %vm1217 = vcmp.eq.f32.partialorder %v1216, 8.507059e+37
      %v1218 = vand.u32 %v1194, 2147483648
      %v1219 = vor.u32 1.1754944e-38, %v1218
      %v1220 = vsel %vm1217, %v1219, %v1215
      %v1221 = vmul.f32 %v1169, %v1220
      %v1222 = vrcp.pop %v1206
      %v1223 = vmul.f32 %v1206, %v1222
      %v1224 = vsub.f32 1.0, %v1223
      %v1225 = vmul.f32 %v1222, %v1224
      %v1226 = vadd.f32 %v1222, %v1225
      %vm1227 = vweird.f32 %v1206
      %vm1228 = vweird.f32 %v1222
      %vm1229 = vmor %vm1227, %vm1228
      %v1230 = vsel %vm1229, %v1222, %v1226
      %v1231 = vand.u32 2147483647, %v1206
      %vm1232 = vcmp.eq.f32.partialorder %v1231, 8.507059e+37
      %v1233 = vand.u32 %v1206, 2147483648
      %v1234 = vor.u32 1.1754944e-38, %v1233
      %v1235 = vsel %vm1232, %v1234, %v1230
      %v1236 = vmul.f32 %v1170, %v1235
      %v1237 = vld [vmem:[%s8] sm:$0x1]
      %v1239 = vperm.slane %v1237, 0
      %v1241 = vmul.f32 %v1221, %v1239
      %v1242 = vmul.f32 %v1236, %v1239
      %v1243 = vld [vmem:[%s9] sm:$0x1]
      %v1245 = vperm.slane %v1243, 0
      %v1247 = vadd.f32 %v1241, %v1245
      %v1248 = vadd.f32 %v1242, %v1245
      %v1249 = vmax.f32 %v1247, 0.0
      %v1250 = vmax.f32 %v1248, 0.0
      %s1251 = scalar_lea.vmem %s4, 64
      %v1252 = vld [vmem:[%s1251] sm:$0xff]
      %v1253 = vld [vmem:[%s1251 + $0x8] sm:$0xff]
      %v1254 = vld [vmem:[%s1251 + $0x10] sm:$0xff]
      %v1255 = vld [vmem:[%s1251 + $0x18] sm:$0xff]
      %v1256 = vld [vmem:[%s1251 + $0x20] sm:$0xff]
      %v1257 = vld [vmem:[%s1251 + $0x28] sm:$0xff]
      %v1258 = vld [vmem:[%s1251 + $0x30] sm:$0xff]
      %v1259 = vld [vmem:[%s1251 + $0x38] sm:$0xff]
      %v1261 = vsel %vm756, %v1249, 0
      %v1264 = vsel %vm756, %v1250, 0
      %1266 = vmatpush.msra.mxu0 0.0
      %1267 = vmatpush.msra.mxu0 0.0
      %1268 = vmatpush.msra.mxu0 0.0
      %1269 = vmatpush.msra.mxu0 0.0
      %1270 = vmatpush.msra.mxu0 0.0
      %1271 = vmatpush.msra.mxu0 0.0
      %1272 = vmatpush.msra.mxu0 0.0
      %1273 = vmatpush.msra.mxu0 0.0
      %1274 = vmatpush.msra.mxu0 %v1259
      %1275 = vmatpush.msra.mxu0 %v1258
      %1276 = vmatpush.msra.mxu0 %v1257
      %1277 = vmatpush.msra.mxu0 %v1256
      %1278 = vmatpush.msra.mxu0 %v1255
      %1279 = vmatpush.msra.mxu0 %v1254
      %1280 = vmatpush.msra.mxu0 %v1253
      %1281 = vmatpush.msra.mxu0 %v1252
      %1282 = vmatmul.f32.gmra.mxu0 %v1261
      %v1283 = vpop.f32.mrf.mxu0
      %v1284 = vadd.f32 0.0, %v1283
      %1285 = vmatmul.f32.gmra.mxu0 %v1264
      %v1286 = vpop.f32.mrf.mxu0
      %v1287 = vadd.f32 0.0, %v1286
      %1288 = vdwg.mxu0
      %s1289 = scalar_lea.vmem %s6, 64
      %v1290 = vld [vmem:[%s1289] sm:$0xff]
      %v1291 = vld [vmem:[%s1289 + $0x8] sm:$0xff]
      %v1292 = vld [vmem:[%s1289 + $0x10] sm:$0xff]
      %v1293 = vld [vmem:[%s1289 + $0x18] sm:$0xff]
      %v1294 = vld [vmem:[%s1289 + $0x20] sm:$0xff]
      %v1295 = vld [vmem:[%s1289 + $0x28] sm:$0xff]
      %v1296 = vld [vmem:[%s1289 + $0x30] sm:$0xff]
      %v1297 = vld [vmem:[%s1289 + $0x38] sm:$0xff]
      %v1299 = vsel %vm756, %v1284, 0
      %v1302 = vsel %vm756, %v1287, 0
      %1304 = vmatpush.msra.mxu0 0.0
      %1305 = vmatpush.msra.mxu0 0.0
      %1306 = vmatpush.msra.mxu0 0.0
      %1307 = vmatpush.msra.mxu0 0.0
      %1308 = vmatpush.msra.mxu0 0.0
      %1309 = vmatpush.msra.mxu0 0.0
      %1310 = vmatpush.msra.mxu0 0.0
      %1311 = vmatpush.msra.mxu0 0.0
      %1312 = vmatpush.msra.mxu0 %v1297
      %1313 = vmatpush.msra.mxu0 %v1296
      %1314 = vmatpush.msra.mxu0 %v1295
      %1315 = vmatpush.msra.mxu0 %v1294
      %1316 = vmatpush.msra.mxu0 %v1293
      %1317 = vmatpush.msra.mxu0 %v1292
      %1318 = vmatpush.msra.mxu0 %v1291
      %1319 = vmatpush.msra.mxu0 %v1290
      %1320 = vmatmul.f32.gmra.mxu0 %v1299
      %v1321 = vpop.f32.mrf.mxu0
      %v1322 = vadd.f32 0.0, %v1321
      %1323 = vmatmul.f32.gmra.mxu0 %v1302
      %v1324 = vpop.f32.mrf.mxu0
      %v1325 = vadd.f32 0.0, %v1324
      %1326 = vdwg.mxu0
      %s1327 = scalar_lea.vmem %s5, 64
      %v1328 = vld [vmem:[%s1327] sm:$0xff]
      %v1329 = vld [vmem:[%s1327 + $0x8] sm:$0xff]
      %v1330 = vld [vmem:[%s1327 + $0x10] sm:$0xff]
      %v1331 = vld [vmem:[%s1327 + $0x18] sm:$0xff]
      %v1332 = vld [vmem:[%s1327 + $0x20] sm:$0xff]
      %v1333 = vld [vmem:[%s1327 + $0x28] sm:$0xff]
      %v1334 = vld [vmem:[%s1327 + $0x30] sm:$0xff]
      %v1335 = vld [vmem:[%s1327 + $0x38] sm:$0xff]
      %1336 = vmatpush.msra.mxu0 0.0
      %1337 = vmatpush.msra.mxu0 0.0
      %1338 = vmatpush.msra.mxu0 0.0
      %1339 = vmatpush.msra.mxu0 0.0
      %1340 = vmatpush.msra.mxu0 0.0
      %1341 = vmatpush.msra.mxu0 0.0
      %1342 = vmatpush.msra.mxu0 0.0
      %1343 = vmatpush.msra.mxu0 0.0
      %1344 = vmatpush.msra.mxu0 %v1335
      %1345 = vmatpush.msra.mxu0 %v1334
      %1346 = vmatpush.msra.mxu0 %v1333
      %1347 = vmatpush.msra.mxu0 %v1332
      %1348 = vmatpush.msra.mxu0 %v1331
      %1349 = vmatpush.msra.mxu0 %v1330
      %1350 = vmatpush.msra.mxu0 %v1329
      %1351 = vmatpush.msra.mxu0 %v1328
      %1352 = vmatmul.f32.gmra.mxu0 %v1299
      %v1353 = vpop.f32.mrf.mxu0
      %v1354 = vadd.f32 0.0, %v1353
      %1355 = vmatmul.f32.gmra.mxu0 %v1302
      %v1356 = vpop.f32.mrf.mxu0
      %v1357 = vadd.f32 0.0, %v1356
      %1358 = vdwg.mxu0
      %v1360 = vsel %vm854, %v1354, 0
      %v1363 = vsel %vm854, %v1357, 0
      %1365 = vmatpush.msra.mxu0 0.0
      %1366 = vmatpush.msra.mxu0 0.0
      %1367 = vmatpush.msra.mxu0 0.0
      %1368 = vmatpush.msra.mxu0 0.0
      %1369 = vmatpush.msra.mxu0 0.0
      %1370 = vmatpush.msra.mxu0 0.0
      %1371 = vmatpush.msra.mxu0 0.0
      %1372 = vmatpush.msra.mxu0 0.0
      %1373 = vmatpush.msra.mxu0 0.0
      %1374 = vmatpush.msra.mxu0 0.0
      %1375 = vmatpush.msra.mxu0 0.0
      %1376 = vmatpush.msra.mxu0 0.0
      %1377 = vmatpush.msra.mxu0 0.0
      %1378 = vmatpush.msra.mxu0 0.0
      %1379 = vmatpush.msra.mxu0 0.0
      %1380 = vmatpush.msra.mxu0 %v627
      %1381 = vmatmul.f32.gmra.mxu0 %v1360
      %v1382 = vpop.f32.mrf.mxu0
      %v1383 = vadd.f32 0.0, %v1382
      %1384 = vmatmul.f32.gmra.mxu0 %v1363
      %v1385 = vpop.f32.mrf.mxu0
      %v1386 = vadd.f32 0.0, %v1385
      %1387 = vdwg.mxu0
      %v1388 = vmul.f32 %v1383, %v644
      %v1389 = vmul.f32 %v1386, %v645
      %v1390 = vadd.f32 %v1388, %v1389
      %v1391 = vrot.slane %v1390, 4
      %v1392 = vadd.f32 %v1390, %v1391
      %v1393 = vrot.slane %v1392, 2
      %v1394 = vadd.f32 %v1392, %v1393
      %v1395 = vrot.slane %v1394, 1
      %v1396 = vadd.f32 %v1394, %v1395
      %v1398 = vsel %vm854, %v1322, 0
      %v1401 = vsel %vm854, %v1325, 0
      %1403 = vmatpush.msra.mxu0 0.0
      %1404 = vmatpush.msra.mxu0 0.0
      %1405 = vmatpush.msra.mxu0 0.0
      %1406 = vmatpush.msra.mxu0 0.0
      %1407 = vmatpush.msra.mxu0 0.0
      %1408 = vmatpush.msra.mxu0 0.0
      %1409 = vmatpush.msra.mxu0 0.0
      %1410 = vmatpush.msra.mxu0 0.0
      %1411 = vmatpush.msra.mxu0 0.0
      %1412 = vmatpush.msra.mxu0 0.0
      %1413 = vmatpush.msra.mxu0 0.0
      %1414 = vmatpush.msra.mxu0 0.0
      %1415 = vmatpush.msra.mxu0 0.0
      %1416 = vmatpush.msra.mxu0 0.0
      %1417 = vmatpush.msra.mxu0 0.0
      %1418 = vmatpush.msra.mxu0 %v627
      %1419 = vmatmul.f32.gmra.mxu0 %v1398
      %v1420 = vpop.f32.mrf.mxu0
      %v1421 = vadd.f32 %v1396, %v1420
      %1422 = vmatmul.f32.gmra.mxu0 %v1401
      %v1423 = vpop.f32.mrf.mxu0
      %v1424 = vadd.f32 %v1396, %v1423
      %1425 = vdwg.mxu0
      %vm1426 = vcmp.gt.f32.partialorder %v1421, 0.0
      %vm1427 = vcmp.gt.f32.partialorder %v1424, 0.0
      %v1428 = vmul.f32 %v1421, 0.2
      %v1429 = vmul.f32 %v1424, 0.2
      %v1430 = vsel %vm1426, %v1421, %v1428
      %v1431 = vsel %vm1427, %v1424, %v1429
      %v1432 = vadd.f32 %v1430, %v703
      %v1433 = vadd.f32 %v1431, %v706
      %1434 = vmax.xlane.f32.xlu0 %v1432
      %v1435 = vpop.xlane.xlu0 %1434
      %1436 = vmax.xlane.f32.xlu0 %v1433
      %v1437 = vpop.xlane.xlu0 %1436
      %v1438 = vsub.f32 %v1432, %v1435
      %v1439 = vsub.f32 %v1433, %v1437
      %v1440 = vmul.f32 %v1438, 1.442695
      %v1441 = vpow.pop %v1440
      %v1442 = vmul.f32 %v1439, 1.442695
      %v1443 = vpow.pop %v1442
      %1444 = vmatpush.msra.mxu0 %v643
      %1445 = vmatpush.msra.mxu0 %v642
      %1446 = vmatpush.msra.mxu0 %v641
      %1447 = vmatpush.msra.mxu0 %v640
      %1448 = vmatpush.msra.mxu0 %v639
      %1449 = vmatpush.msra.mxu0 %v638
      %1450 = vmatpush.msra.mxu0 %v637
      %1451 = vmatpush.msra.mxu0 %v636
      %1452 = vmatpush.msra.mxu0 %v635
      %1453 = vmatpush.msra.mxu0 %v634
      %1454 = vmatpush.msra.mxu0 %v633
      %1455 = vmatpush.msra.mxu0 %v632
      %1456 = vmatpush.msra.mxu0 %v631
      %1457 = vmatpush.msra.mxu0 %v630
      %1458 = vmatpush.msra.mxu0 %v629
      %1459 = vmatpush.msra.mxu0 %v628
      %1460 = vmatmul.f32.gmra.mxu0 %v1441
      %v1461 = vpop.f32.mrf.mxu0
      %v1462 = vadd.f32 0.0, %v1461
      %1463 = vmatmul.f32.gmra.mxu0 %v1443
      %v1464 = vpop.f32.mrf.mxu0
      %v1465 = vadd.f32 0.0, %v1464
      %1466 = vdwg.mxu0
      %v1467 = vrcp.pop %v1462
      %v1468 = vrcp.pop %v1465
      %v1470 = vsel %vm854, %v1467, 0
      %v1473 = vsel %vm854, %v1468, 0
      %1475 = vmatpush.msra.mxu0 0.0
      %1476 = vmatpush.msra.mxu0 0.0
      %1477 = vmatpush.msra.mxu0 0.0
      %1478 = vmatpush.msra.mxu0 0.0
      %1479 = vmatpush.msra.mxu0 0.0
      %1480 = vmatpush.msra.mxu0 0.0
      %1481 = vmatpush.msra.mxu0 0.0
      %1482 = vmatpush.msra.mxu0 0.0
      %1483 = vmatpush.msra.mxu0 0.0
      %1484 = vmatpush.msra.mxu0 0.0
      %1485 = vmatpush.msra.mxu0 0.0
      %1486 = vmatpush.msra.mxu0 0.0
      %1487 = vmatpush.msra.mxu0 0.0
      %1488 = vmatpush.msra.mxu0 0.0
      %1489 = vmatpush.msra.mxu0 0.0
      %1490 = vmatpush.msra.mxu0 %v627
      %1491 = vmatmul.f32.gmra.mxu0 %v1470
      %v1492 = vpop.f32.mrf.mxu0
      %v1493 = vadd.f32 0.0, %v1492
      %1494 = vmatmul.f32.gmra.mxu0 %v1473
      %v1495 = vpop.f32.mrf.mxu0
      %v1496 = vadd.f32 0.0, %v1495
      %1497 = vdwg.mxu0
      %v1498 = vmul.f32 %v1441, %v1493
      %v1499 = vmul.f32 %v1443, %v1496
      %1500 = vmatpush.msra.mxu0 0.0
      %1501 = vmatpush.msra.mxu0 0.0
      %1502 = vmatpush.msra.mxu0 0.0
      %1503 = vmatpush.msra.mxu0 0.0
      %1504 = vmatpush.msra.mxu0 0.0
      %1505 = vmatpush.msra.mxu0 0.0
      %1506 = vmatpush.msra.mxu0 0.0
      %1507 = vmatpush.msra.mxu0 0.0
      %1508 = vmatpush.msra.mxu0 0.0
      %1509 = vmatpush.msra.mxu0 0.0
      %1510 = vmatpush.msra.mxu0 0.0
      %1511 = vmatpush.msra.mxu0 0.0
      %1512 = vmatpush.msra.mxu0 0.0
      %1513 = vmatpush.msra.mxu0 0.0
      %1514 = vmatpush.msra.mxu0 %v1287
      %1515 = vmatpush.msra.mxu0 %v1284
      %1516 = vmatmul.f32.gmra.mxu0 %v997
      %v1517 = vpop.f32.mrf.mxu0
      %v1518 = vadd.f32 0.0, %v1517
      %1519 = vmatmul.f32.gmra.mxu0 %v1000
      %v1520 = vpop.f32.mrf.mxu0
      %v1521 = vadd.f32 0.0, %v1520
      %1522 = vmatmul.f32.gmra.mxu0 %v1003
      %v1523 = vpop.f32.mrf.mxu0
      %v1524 = vadd.f32 0.0, %v1523
      %1525 = vmatmul.f32.gmra.mxu0 %v1006
      %v1526 = vpop.f32.mrf.mxu0
      %v1527 = vadd.f32 0.0, %v1526
      %1528 = vmatmul.f32.gmra.mxu0 %v1009
      %v1529 = vpop.f32.mrf.mxu0
      %v1530 = vadd.f32 0.0, %v1529
      %1531 = vmatmul.f32.gmra.mxu0 %v1012
      %v1532 = vpop.f32.mrf.mxu0
      %v1533 = vadd.f32 0.0, %v1532
      %1534 = vmatmul.f32.gmra.mxu0 %v1015
      %v1535 = vpop.f32.mrf.mxu0
      %v1536 = vadd.f32 0.0, %v1535
      %1537 = vmatmul.f32.gmra.mxu0 %v1018
      %v1538 = vpop.f32.mrf.mxu0
      %v1539 = vadd.f32 0.0, %v1538
      %1540 = vmatmul.f32.gmra.mxu0 %v1021
      %v1541 = vpop.f32.mrf.mxu0
      %v1542 = vadd.f32 0.0, %v1541
      %1543 = vmatmul.f32.gmra.mxu0 %v1024
      %v1544 = vpop.f32.mrf.mxu0
      %v1545 = vadd.f32 0.0, %v1544
      %1546 = vmatmul.f32.gmra.mxu0 %v1027
      %v1547 = vpop.f32.mrf.mxu0
      %v1548 = vadd.f32 0.0, %v1547
      %1549 = vmatmul.f32.gmra.mxu0 %v1030
      %v1550 = vpop.f32.mrf.mxu0
      %v1551 = vadd.f32 0.0, %v1550
      %1552 = vmatmul.f32.gmra.mxu0 %v1033
      %v1553 = vpop.f32.mrf.mxu0
      %v1554 = vadd.f32 0.0, %v1553
      %1555 = vmatmul.f32.gmra.mxu0 %v1036
      %v1556 = vpop.f32.mrf.mxu0
      %v1557 = vadd.f32 0.0, %v1556
      %1558 = vmatmul.f32.gmra.mxu0 %v1039
      %v1559 = vpop.f32.mrf.mxu0
      %v1560 = vadd.f32 0.0, %v1559
      %1561 = vmatmul.f32.gmra.mxu0 %v1042
      %v1562 = vpop.f32.mrf.mxu0
      %v1563 = vadd.f32 0.0, %v1562
      %1564 = vdwg.mxu0
      %v1565 = vmul.f32 %v1518, %v662
      %v1566 = vmul.f32 %v1521, %v663
      %v1567 = vmul.f32 %v1524, %v664
      %v1568 = vmul.f32 %v1527, %v665
      %v1569 = vmul.f32 %v1530, %v666
      %v1570 = vmul.f32 %v1533, %v667
      %v1571 = vmul.f32 %v1536, %v668
      %v1572 = vmul.f32 %v1539, %v669
      %v1573 = vmul.f32 %v1542, %v670
      %v1574 = vmul.f32 %v1545, %v671
      %v1575 = vmul.f32 %v1548, %v672
      %v1576 = vmul.f32 %v1551, %v673
      %v1577 = vmul.f32 %v1554, %v674
      %v1578 = vmul.f32 %v1557, %v675
      %v1579 = vmul.f32 %v1560, %v676
      %v1580 = vmul.f32 %v1563, %v677
      %s1581 = scalar_lea.vmem %s7, 1
      %v1582 = vld [vmem:[%s1581] sm:$0x1]
      %v1584 = vperm.slane %v1582, 0
      %1586 = vmatpush.msra.mxu0 %v1580
      %1587 = vmatpush.msra.mxu0 %v1579
      %1588 = vmatpush.msra.mxu0 %v1578
      %1589 = vmatpush.msra.mxu0 %v1577
      %1590 = vmatpush.msra.mxu0 %v1576
      %1591 = vmatpush.msra.mxu0 %v1575
      %1592 = vmatpush.msra.mxu0 %v1574
      %1593 = vmatpush.msra.mxu0 %v1573
      %1594 = vmatpush.msra.mxu0 %v1572
      %1595 = vmatpush.msra.mxu0 %v1571
      %1596 = vmatpush.msra.mxu0 %v1570
      %1597 = vmatpush.msra.mxu0 %v1569
      %1598 = vmatpush.msra.mxu0 %v1568
      %1599 = vmatpush.msra.mxu0 %v1567
      %1600 = vmatpush.msra.mxu0 %v1566
      %1601 = vmatpush.msra.mxu0 %v1565
      %1602 = vmatmul.f32.gmra.mxu0 %v1498
      %v1603 = vpop.f32.mrf.mxu0
      %v1604 = vadd.f32 %v1584, %v1603
      %1605 = vmatmul.f32.gmra.mxu0 %v1499
      %v1606 = vpop.f32.mrf.mxu0
      %v1607 = vadd.f32 %v1584, %v1606
      %1608 = vdwg.mxu0
      %v1609 = vadd.f32 %v1604, %v1249
      %v1610 = vadd.f32 %v1607, %v1250
      %v1611 = vsel %vm756, %v1609, 0.0
      %1612 = vadd.xlane.f32.xlu0 %v1611
      %v1613 = vpop.xlane.xlu0 %1612
      %v1614 = vsel %vm756, %v1610, 0.0
      %1615 = vadd.xlane.f32.xlu0 %v1614
      %v1616 = vpop.xlane.xlu0 %1615
      %v1617 = vmul.f32 %v1613, %v1166
      %v1618 = vmul.f32 %v1616, %v1166
      %v1619 = vsub.f32 %v1609, %v1617
      %v1620 = vsub.f32 %v1610, %v1618
      %v1621 = vmul.f32 %v1619, %v1619
      %v1622 = vmul.f32 %v1620, %v1620
      %v1623 = vsel %vm756, %v1621, 0.0
      %1624 = vadd.xlane.f32.xlu0 %v1623
      %v1625 = vpop.xlane.xlu0 %1624
      %v1626 = vsel %vm756, %v1622, 0.0
      %1627 = vadd.xlane.f32.xlu0 %v1626
      %v1628 = vpop.xlane.xlu0 %1627
      %v1629 = vmul.f32 %v1625, %v1166
      %v1630 = vmul.f32 %v1628, %v1166
      %v1631 = vadd.f32 %v1629, 1e-05
      %v1632 = vadd.f32 %v1630, 1e-05
      %v1633 = vrsqrt.pop %v1631
      %v1634 = vmul.f32 %v1633, %v1631
      %v1635 = vmul.f32 %v1634, %v1633
      %v1636 = vmul.f32 0.5, %v1635
      %v1637 = vsub.f32 1.5, %v1636
      %v1638 = vmul.f32 %v1633, %v1637
      %v1639 = vmul.f32 %v1631, %v1638
      %vm1640 = vcmp.eq.f32.partialorder %v1631, inf
      %v1641 = vsel %vm1640, %v1631, %v1639
      %vm1642 = vcmp.eq.f32.partialorder %v1631, 0.0
      %v1643 = vand.u32 %v1631, 2147483648
      %v1644 = vsel %vm1642, %v1643, %v1641
      %v1645 = vrsqrt.pop %v1632
      %v1646 = vmul.f32 %v1645, %v1632
      %v1647 = vmul.f32 %v1646, %v1645
      %v1648 = vmul.f32 0.5, %v1647
      %v1649 = vsub.f32 1.5, %v1648
      %v1650 = vmul.f32 %v1645, %v1649
      %v1651 = vmul.f32 %v1632, %v1650
      %vm1652 = vcmp.eq.f32.partialorder %v1632, inf
      %v1653 = vsel %vm1652, %v1632, %v1651
      %vm1654 = vcmp.eq.f32.partialorder %v1632, 0.0
      %v1655 = vand.u32 %v1632, 2147483648
      %v1656 = vsel %vm1654, %v1655, %v1653
      %v1657 = vrcp.pop %v1644
      %v1658 = vmul.f32 %v1644, %v1657
      %v1659 = vsub.f32 1.0, %v1658
      %v1660 = vmul.f32 %v1657, %v1659
      %v1661 = vadd.f32 %v1657, %v1660
      %vm1662 = vweird.f32 %v1644
      %vm1663 = vweird.f32 %v1657
      %vm1664 = vmor %vm1662, %vm1663
      %v1665 = vsel %vm1664, %v1657, %v1661
      %v1666 = vand.u32 2147483647, %v1644
      %vm1667 = vcmp.eq.f32.partialorder %v1666, 8.507059e+37
      %v1668 = vand.u32 %v1644, 2147483648
      %v1669 = vor.u32 1.1754944e-38, %v1668
      %v1670 = vsel %vm1667, %v1669, %v1665
      %v1671 = vmul.f32 %v1619, %v1670
      %v1672 = vrcp.pop %v1656
      %v1673 = vmul.f32 %v1656, %v1672
      %v1674 = vsub.f32 1.0, %v1673
      %v1675 = vmul.f32 %v1672, %v1674
      %v1676 = vadd.f32 %v1672, %v1675
      %vm1677 = vweird.f32 %v1656
      %vm1678 = vweird.f32 %v1672
      %vm1679 = vmor %vm1677, %vm1678
      %v1680 = vsel %vm1679, %v1672, %v1676
      %v1681 = vand.u32 2147483647, %v1656
      %vm1682 = vcmp.eq.f32.partialorder %v1681, 8.507059e+37
      %v1683 = vand.u32 %v1656, 2147483648
      %v1684 = vor.u32 1.1754944e-38, %v1683
      %v1685 = vsel %vm1682, %v1684, %v1680
      %v1686 = vmul.f32 %v1620, %v1685
      %s1687 = scalar_lea.vmem %s8, 1
      %v1688 = vld [vmem:[%s1687] sm:$0x1]
      %v1690 = vperm.slane %v1688, 0
      %v1692 = vmul.f32 %v1671, %v1690
      %v1693 = vmul.f32 %v1686, %v1690
      %s1694 = scalar_lea.vmem %s9, 1
      %v1695 = vld [vmem:[%s1694] sm:$0x1]
      %v1697 = vperm.slane %v1695, 0
      %v1699 = vadd.f32 %v1692, %v1697
      %v1700 = vadd.f32 %v1693, %v1697
      %v1701 = vmax.f32 %v1699, 0.0
      %v1702 = vmax.f32 %v1700, 0.0
      %s1703 = scalar_lea.vmem %s4, 128
      %v1704 = vld [vmem:[%s1703] sm:$0xff]
      %v1705 = vld [vmem:[%s1703 + $0x8] sm:$0xff]
      %v1706 = vld [vmem:[%s1703 + $0x10] sm:$0xff]
      %v1707 = vld [vmem:[%s1703 + $0x18] sm:$0xff]
      %v1708 = vld [vmem:[%s1703 + $0x20] sm:$0xff]
      %v1709 = vld [vmem:[%s1703 + $0x28] sm:$0xff]
      %v1710 = vld [vmem:[%s1703 + $0x30] sm:$0xff]
      %v1711 = vld [vmem:[%s1703 + $0x38] sm:$0xff]
      %v1713 = vsel %vm756, %v1701, 0
      %v1716 = vsel %vm756, %v1702, 0
      %1718 = vmatpush.msra.mxu0 0.0
      %1719 = vmatpush.msra.mxu0 0.0
      %1720 = vmatpush.msra.mxu0 0.0
      %1721 = vmatpush.msra.mxu0 0.0
      %1722 = vmatpush.msra.mxu0 0.0
      %1723 = vmatpush.msra.mxu0 0.0
      %1724 = vmatpush.msra.mxu0 0.0
      %1725 = vmatpush.msra.mxu0 0.0
      %1726 = vmatpush.msra.mxu0 %v1711
      %1727 = vmatpush.msra.mxu0 %v1710
      %1728 = vmatpush.msra.mxu0 %v1709
      %1729 = vmatpush.msra.mxu0 %v1708
      %1730 = vmatpush.msra.mxu0 %v1707
      %1731 = vmatpush.msra.mxu0 %v1706
      %1732 = vmatpush.msra.mxu0 %v1705
      %1733 = vmatpush.msra.mxu0 %v1704
      %1734 = vmatmul.f32.gmra.mxu0 %v1713
      %v1735 = vpop.f32.mrf.mxu0
      %v1736 = vadd.f32 0.0, %v1735
      %1737 = vmatmul.f32.gmra.mxu0 %v1716
      %v1738 = vpop.f32.mrf.mxu0
      %v1739 = vadd.f32 0.0, %v1738
      %1740 = vdwg.mxu0
      %s1741 = scalar_lea.vmem %s6, 128
      %v1742 = vld [vmem:[%s1741] sm:$0xff]
      %v1743 = vld [vmem:[%s1741 + $0x8] sm:$0xff]
      %v1744 = vld [vmem:[%s1741 + $0x10] sm:$0xff]
      %v1745 = vld [vmem:[%s1741 + $0x18] sm:$0xff]
      %v1746 = vld [vmem:[%s1741 + $0x20] sm:$0xff]
      %v1747 = vld [vmem:[%s1741 + $0x28] sm:$0xff]
      %v1748 = vld [vmem:[%s1741 + $0x30] sm:$0xff]
      %v1749 = vld [vmem:[%s1741 + $0x38] sm:$0xff]
      %v1751 = vsel %vm756, %v1736, 0
      %v1754 = vsel %vm756, %v1739, 0
      %1756 = vmatpush.msra.mxu0 0.0
      %1757 = vmatpush.msra.mxu0 0.0
      %1758 = vmatpush.msra.mxu0 0.0
      %1759 = vmatpush.msra.mxu0 0.0
      %1760 = vmatpush.msra.mxu0 0.0
      %1761 = vmatpush.msra.mxu0 0.0
      %1762 = vmatpush.msra.mxu0 0.0
      %1763 = vmatpush.msra.mxu0 0.0
      %1764 = vmatpush.msra.mxu0 %v1749
      %1765 = vmatpush.msra.mxu0 %v1748
      %1766 = vmatpush.msra.mxu0 %v1747
      %1767 = vmatpush.msra.mxu0 %v1746
      %1768 = vmatpush.msra.mxu0 %v1745
      %1769 = vmatpush.msra.mxu0 %v1744
      %1770 = vmatpush.msra.mxu0 %v1743
      %1771 = vmatpush.msra.mxu0 %v1742
      %1772 = vmatmul.f32.gmra.mxu0 %v1751
      %v1773 = vpop.f32.mrf.mxu0
      %v1774 = vadd.f32 0.0, %v1773
      %1775 = vmatmul.f32.gmra.mxu0 %v1754
      %v1776 = vpop.f32.mrf.mxu0
      %v1777 = vadd.f32 0.0, %v1776
      %1778 = vdwg.mxu0
      %s1779 = scalar_lea.vmem %s5, 128
      %v1780 = vld [vmem:[%s1779] sm:$0xff]
      %v1781 = vld [vmem:[%s1779 + $0x8] sm:$0xff]
      %v1782 = vld [vmem:[%s1779 + $0x10] sm:$0xff]
      %v1783 = vld [vmem:[%s1779 + $0x18] sm:$0xff]
      %v1784 = vld [vmem:[%s1779 + $0x20] sm:$0xff]
      %v1785 = vld [vmem:[%s1779 + $0x28] sm:$0xff]
      %v1786 = vld [vmem:[%s1779 + $0x30] sm:$0xff]
      %v1787 = vld [vmem:[%s1779 + $0x38] sm:$0xff]
      %1788 = vmatpush.msra.mxu0 0.0
      %1789 = vmatpush.msra.mxu0 0.0
      %1790 = vmatpush.msra.mxu0 0.0
      %1791 = vmatpush.msra.mxu0 0.0
      %1792 = vmatpush.msra.mxu0 0.0
      %1793 = vmatpush.msra.mxu0 0.0
      %1794 = vmatpush.msra.mxu0 0.0
      %1795 = vmatpush.msra.mxu0 0.0
      %1796 = vmatpush.msra.mxu0 %v1787
      %1797 = vmatpush.msra.mxu0 %v1786
      %1798 = vmatpush.msra.mxu0 %v1785
      %1799 = vmatpush.msra.mxu0 %v1784
      %1800 = vmatpush.msra.mxu0 %v1783
      %1801 = vmatpush.msra.mxu0 %v1782
      %1802 = vmatpush.msra.mxu0 %v1781
      %1803 = vmatpush.msra.mxu0 %v1780
      %1804 = vmatmul.f32.gmra.mxu0 %v1751
      %v1805 = vpop.f32.mrf.mxu0
      %v1806 = vadd.f32 0.0, %v1805
      %1807 = vmatmul.f32.gmra.mxu0 %v1754
      %v1808 = vpop.f32.mrf.mxu0
      %v1809 = vadd.f32 0.0, %v1808
      %1810 = vdwg.mxu0
      %v1812 = vsel %vm854, %v1806, 0
      %v1815 = vsel %vm854, %v1809, 0
      %1817 = vmatpush.msra.mxu0 0.0
      %1818 = vmatpush.msra.mxu0 0.0
      %1819 = vmatpush.msra.mxu0 0.0
      %1820 = vmatpush.msra.mxu0 0.0
      %1821 = vmatpush.msra.mxu0 0.0
      %1822 = vmatpush.msra.mxu0 0.0
      %1823 = vmatpush.msra.mxu0 0.0
      %1824 = vmatpush.msra.mxu0 0.0
      %1825 = vmatpush.msra.mxu0 0.0
      %1826 = vmatpush.msra.mxu0 0.0
      %1827 = vmatpush.msra.mxu0 0.0
      %1828 = vmatpush.msra.mxu0 0.0
      %1829 = vmatpush.msra.mxu0 0.0
      %1830 = vmatpush.msra.mxu0 0.0
      %1831 = vmatpush.msra.mxu0 0.0
      %1832 = vmatpush.msra.mxu0 %v627
      %1833 = vmatmul.f32.gmra.mxu0 %v1812
      %v1834 = vpop.f32.mrf.mxu0
      %v1835 = vadd.f32 0.0, %v1834
      %1836 = vmatmul.f32.gmra.mxu0 %v1815
      %v1837 = vpop.f32.mrf.mxu0
      %v1838 = vadd.f32 0.0, %v1837
      %1839 = vdwg.mxu0
      %v1840 = vmul.f32 %v1835, %v644
      %v1841 = vmul.f32 %v1838, %v645
      %v1842 = vadd.f32 %v1840, %v1841
      %v1843 = vrot.slane %v1842, 4
      %v1844 = vadd.f32 %v1842, %v1843
      %v1845 = vrot.slane %v1844, 2
      %v1846 = vadd.f32 %v1844, %v1845
      %v1847 = vrot.slane %v1846, 1
      %v1848 = vadd.f32 %v1846, %v1847
      %v1850 = vsel %vm854, %v1774, 0
      %v1853 = vsel %vm854, %v1777, 0
      %1855 = vmatpush.msra.mxu0 0.0
      %1856 = vmatpush.msra.mxu0 0.0
      %1857 = vmatpush.msra.mxu0 0.0
      %1858 = vmatpush.msra.mxu0 0.0
      %1859 = vmatpush.msra.mxu0 0.0
      %1860 = vmatpush.msra.mxu0 0.0
      %1861 = vmatpush.msra.mxu0 0.0
      %1862 = vmatpush.msra.mxu0 0.0
      %1863 = vmatpush.msra.mxu0 0.0
      %1864 = vmatpush.msra.mxu0 0.0
      %1865 = vmatpush.msra.mxu0 0.0
      %1866 = vmatpush.msra.mxu0 0.0
      %1867 = vmatpush.msra.mxu0 0.0
      %1868 = vmatpush.msra.mxu0 0.0
      %1869 = vmatpush.msra.mxu0 0.0
      %1870 = vmatpush.msra.mxu0 %v627
      %1871 = vmatmul.f32.gmra.mxu0 %v1850
      %v1872 = vpop.f32.mrf.mxu0
      %v1873 = vadd.f32 %v1848, %v1872
      %1874 = vmatmul.f32.gmra.mxu0 %v1853
      %v1875 = vpop.f32.mrf.mxu0
      %v1876 = vadd.f32 %v1848, %v1875
      %1877 = vdwg.mxu0
      %vm1878 = vcmp.gt.f32.partialorder %v1873, 0.0
      %vm1879 = vcmp.gt.f32.partialorder %v1876, 0.0
      %v1880 = vmul.f32 %v1873, 0.2
      %v1881 = vmul.f32 %v1876, 0.2
      %v1882 = vsel %vm1878, %v1873, %v1880
      %v1883 = vsel %vm1879, %v1876, %v1881
      %v1884 = vadd.f32 %v1882, %v703
      %v1885 = vadd.f32 %v1883, %v706
      %1886 = vmax.xlane.f32.xlu0 %v1884
      %v1887 = vpop.xlane.xlu0 %1886
      %1888 = vmax.xlane.f32.xlu0 %v1885
      %v1889 = vpop.xlane.xlu0 %1888
      %v1890 = vsub.f32 %v1884, %v1887
      %v1891 = vsub.f32 %v1885, %v1889
      %v1892 = vmul.f32 %v1890, 1.442695
      %v1893 = vpow.pop %v1892
      %v1894 = vmul.f32 %v1891, 1.442695
      %v1895 = vpow.pop %v1894
      %1896 = vmatpush.msra.mxu0 %v643
      %1897 = vmatpush.msra.mxu0 %v642
      %1898 = vmatpush.msra.mxu0 %v641
      %1899 = vmatpush.msra.mxu0 %v640
      %1900 = vmatpush.msra.mxu0 %v639
      %1901 = vmatpush.msra.mxu0 %v638
      %1902 = vmatpush.msra.mxu0 %v637
      %1903 = vmatpush.msra.mxu0 %v636
      %1904 = vmatpush.msra.mxu0 %v635
      %1905 = vmatpush.msra.mxu0 %v634
      %1906 = vmatpush.msra.mxu0 %v633
      %1907 = vmatpush.msra.mxu0 %v632
      %1908 = vmatpush.msra.mxu0 %v631
      %1909 = vmatpush.msra.mxu0 %v630
      %1910 = vmatpush.msra.mxu0 %v629
      %1911 = vmatpush.msra.mxu0 %v628
      %1912 = vmatmul.f32.gmra.mxu0 %v1893
      %v1913 = vpop.f32.mrf.mxu0
      %v1914 = vadd.f32 0.0, %v1913
      %1915 = vmatmul.f32.gmra.mxu0 %v1895
      %v1916 = vpop.f32.mrf.mxu0
      %v1917 = vadd.f32 0.0, %v1916
      %1918 = vdwg.mxu0
      %v1919 = vrcp.pop %v1914
      %v1920 = vrcp.pop %v1917
      %v1922 = vsel %vm854, %v1919, 0
      %v1925 = vsel %vm854, %v1920, 0
      %1927 = vmatpush.msra.mxu0 0.0
      %1928 = vmatpush.msra.mxu0 0.0
      %1929 = vmatpush.msra.mxu0 0.0
      %1930 = vmatpush.msra.mxu0 0.0
      %1931 = vmatpush.msra.mxu0 0.0
      %1932 = vmatpush.msra.mxu0 0.0
      %1933 = vmatpush.msra.mxu0 0.0
      %1934 = vmatpush.msra.mxu0 0.0
      %1935 = vmatpush.msra.mxu0 0.0
      %1936 = vmatpush.msra.mxu0 0.0
      %1937 = vmatpush.msra.mxu0 0.0
      %1938 = vmatpush.msra.mxu0 0.0
      %1939 = vmatpush.msra.mxu0 0.0
      %1940 = vmatpush.msra.mxu0 0.0
      %1941 = vmatpush.msra.mxu0 0.0
      %1942 = vmatpush.msra.mxu0 %v627
      %1943 = vmatmul.f32.gmra.mxu0 %v1922
      %v1944 = vpop.f32.mrf.mxu0
      %v1945 = vadd.f32 0.0, %v1944
      %1946 = vmatmul.f32.gmra.mxu0 %v1925
      %v1947 = vpop.f32.mrf.mxu0
      %v1948 = vadd.f32 0.0, %v1947
      %1949 = vdwg.mxu0
      %v1950 = vmul.f32 %v1893, %v1945
      %v1951 = vmul.f32 %v1895, %v1948
      %1952 = vmatpush.msra.mxu0 0.0
      %1953 = vmatpush.msra.mxu0 0.0
      %1954 = vmatpush.msra.mxu0 0.0
      %1955 = vmatpush.msra.mxu0 0.0
      %1956 = vmatpush.msra.mxu0 0.0
      %1957 = vmatpush.msra.mxu0 0.0
      %1958 = vmatpush.msra.mxu0 0.0
      %1959 = vmatpush.msra.mxu0 0.0
      %1960 = vmatpush.msra.mxu0 0.0
      %1961 = vmatpush.msra.mxu0 0.0
      %1962 = vmatpush.msra.mxu0 0.0
      %1963 = vmatpush.msra.mxu0 0.0
      %1964 = vmatpush.msra.mxu0 0.0
      %1965 = vmatpush.msra.mxu0 0.0
      %1966 = vmatpush.msra.mxu0 %v1739
      %1967 = vmatpush.msra.mxu0 %v1736
      %1968 = vmatmul.f32.gmra.mxu0 %v997
      %v1969 = vpop.f32.mrf.mxu0
      %v1970 = vadd.f32 0.0, %v1969
      %1971 = vmatmul.f32.gmra.mxu0 %v1000
      %v1972 = vpop.f32.mrf.mxu0
      %v1973 = vadd.f32 0.0, %v1972
      %1974 = vmatmul.f32.gmra.mxu0 %v1003
      %v1975 = vpop.f32.mrf.mxu0
      %v1976 = vadd.f32 0.0, %v1975
      %1977 = vmatmul.f32.gmra.mxu0 %v1006
      %v1978 = vpop.f32.mrf.mxu0
      %v1979 = vadd.f32 0.0, %v1978
      %1980 = vmatmul.f32.gmra.mxu0 %v1009
      %v1981 = vpop.f32.mrf.mxu0
      %v1982 = vadd.f32 0.0, %v1981
      %1983 = vmatmul.f32.gmra.mxu0 %v1012
      %v1984 = vpop.f32.mrf.mxu0
      %v1985 = vadd.f32 0.0, %v1984
      %1986 = vmatmul.f32.gmra.mxu0 %v1015
      %v1987 = vpop.f32.mrf.mxu0
      %v1988 = vadd.f32 0.0, %v1987
      %1989 = vmatmul.f32.gmra.mxu0 %v1018
      %v1990 = vpop.f32.mrf.mxu0
      %v1991 = vadd.f32 0.0, %v1990
      %1992 = vmatmul.f32.gmra.mxu0 %v1021
      %v1993 = vpop.f32.mrf.mxu0
      %v1994 = vadd.f32 0.0, %v1993
      %1995 = vmatmul.f32.gmra.mxu0 %v1024
      %v1996 = vpop.f32.mrf.mxu0
      %v1997 = vadd.f32 0.0, %v1996
      %1998 = vmatmul.f32.gmra.mxu0 %v1027
      %v1999 = vpop.f32.mrf.mxu0
      %v2000 = vadd.f32 0.0, %v1999
      %2001 = vmatmul.f32.gmra.mxu0 %v1030
      %v2002 = vpop.f32.mrf.mxu0
      %v2003 = vadd.f32 0.0, %v2002
      %2004 = vmatmul.f32.gmra.mxu0 %v1033
      %v2005 = vpop.f32.mrf.mxu0
      %v2006 = vadd.f32 0.0, %v2005
      %2007 = vmatmul.f32.gmra.mxu0 %v1036
      %v2008 = vpop.f32.mrf.mxu0
      %v2009 = vadd.f32 0.0, %v2008
      %2010 = vmatmul.f32.gmra.mxu0 %v1039
      %v2011 = vpop.f32.mrf.mxu0
      %v2012 = vadd.f32 0.0, %v2011
      %2013 = vmatmul.f32.gmra.mxu0 %v1042
      %v2014 = vpop.f32.mrf.mxu0
      %v2015 = vadd.f32 0.0, %v2014
      %2016 = vdwg.mxu0
      %v2017 = vmul.f32 %v1970, %v662
      %v2018 = vmul.f32 %v1973, %v663
      %v2019 = vmul.f32 %v1976, %v664
      %v2020 = vmul.f32 %v1979, %v665
      %v2021 = vmul.f32 %v1982, %v666
      %v2022 = vmul.f32 %v1985, %v667
      %v2023 = vmul.f32 %v1988, %v668
      %v2024 = vmul.f32 %v1991, %v669
      %v2025 = vmul.f32 %v1994, %v670
      %v2026 = vmul.f32 %v1997, %v671
      %v2027 = vmul.f32 %v2000, %v672
      %v2028 = vmul.f32 %v2003, %v673
      %v2029 = vmul.f32 %v2006, %v674
      %v2030 = vmul.f32 %v2009, %v675
      %v2031 = vmul.f32 %v2012, %v676
      %v2032 = vmul.f32 %v2015, %v677
      %s2033 = scalar_lea.vmem %s7, 2
      %v2034 = vld [vmem:[%s2033] sm:$0x1]
      %v2036 = vperm.slane %v2034, 0
      %2038 = vmatpush.msra.mxu0 %v2032
      %2039 = vmatpush.msra.mxu0 %v2031
      %2040 = vmatpush.msra.mxu0 %v2030
      %2041 = vmatpush.msra.mxu0 %v2029
      %2042 = vmatpush.msra.mxu0 %v2028
      %2043 = vmatpush.msra.mxu0 %v2027
      %2044 = vmatpush.msra.mxu0 %v2026
      %2045 = vmatpush.msra.mxu0 %v2025
      %2046 = vmatpush.msra.mxu0 %v2024
      %2047 = vmatpush.msra.mxu0 %v2023
      %2048 = vmatpush.msra.mxu0 %v2022
      %2049 = vmatpush.msra.mxu0 %v2021
      %2050 = vmatpush.msra.mxu0 %v2020
      %2051 = vmatpush.msra.mxu0 %v2019
      %2052 = vmatpush.msra.mxu0 %v2018
      %2053 = vmatpush.msra.mxu0 %v2017
      %2054 = vmatmul.f32.gmra.mxu0 %v1950
      %v2055 = vpop.f32.mrf.mxu0
      %v2056 = vadd.f32 %v2036, %v2055
      %2057 = vmatmul.f32.gmra.mxu0 %v1951
      %v2058 = vpop.f32.mrf.mxu0
      %v2059 = vadd.f32 %v2036, %v2058
      %2060 = vdwg.mxu0
      %v2061 = vadd.f32 %v2056, %v1701
      %v2062 = vadd.f32 %v2059, %v1702
      %v2063 = vsel %vm756, %v2061, 0.0
      %2064 = vadd.xlane.f32.xlu0 %v2063
      %v2065 = vpop.xlane.xlu0 %2064
      %v2066 = vsel %vm756, %v2062, 0.0
      %2067 = vadd.xlane.f32.xlu0 %v2066
      %v2068 = vpop.xlane.xlu0 %2067
      %v2069 = vmul.f32 %v2065, %v1166
      %v2070 = vmul.f32 %v2068, %v1166
      %v2071 = vsub.f32 %v2061, %v2069
      %v2072 = vsub.f32 %v2062, %v2070
      %v2073 = vmul.f32 %v2071, %v2071
      %v2074 = vmul.f32 %v2072, %v2072
      %v2075 = vsel %vm756, %v2073, 0.0
      %2076 = vadd.xlane.f32.xlu0 %v2075
      %v2077 = vpop.xlane.xlu0 %2076
      %v2078 = vsel %vm756, %v2074, 0.0
      %2079 = vadd.xlane.f32.xlu0 %v2078
      %v2080 = vpop.xlane.xlu0 %2079
      %v2081 = vmul.f32 %v2077, %v1166
      %v2082 = vmul.f32 %v2080, %v1166
      %v2083 = vadd.f32 %v2081, 1e-05
      %v2084 = vadd.f32 %v2082, 1e-05
      %v2085 = vrsqrt.pop %v2083
      %v2086 = vmul.f32 %v2085, %v2083
      %v2087 = vmul.f32 %v2086, %v2085
      %v2088 = vmul.f32 0.5, %v2087
      %v2089 = vsub.f32 1.5, %v2088
      %v2090 = vmul.f32 %v2085, %v2089
      %v2091 = vmul.f32 %v2083, %v2090
      %vm2092 = vcmp.eq.f32.partialorder %v2083, inf
      %v2093 = vsel %vm2092, %v2083, %v2091
      %vm2094 = vcmp.eq.f32.partialorder %v2083, 0.0
      %v2095 = vand.u32 %v2083, 2147483648
      %v2096 = vsel %vm2094, %v2095, %v2093
      %v2097 = vrsqrt.pop %v2084
      %v2098 = vmul.f32 %v2097, %v2084
      %v2099 = vmul.f32 %v2098, %v2097
      %v2100 = vmul.f32 0.5, %v2099
      %v2101 = vsub.f32 1.5, %v2100
      %v2102 = vmul.f32 %v2097, %v2101
      %v2103 = vmul.f32 %v2084, %v2102
      %vm2104 = vcmp.eq.f32.partialorder %v2084, inf
      %v2105 = vsel %vm2104, %v2084, %v2103
      %vm2106 = vcmp.eq.f32.partialorder %v2084, 0.0
      %v2107 = vand.u32 %v2084, 2147483648
      %v2108 = vsel %vm2106, %v2107, %v2105
      %v2109 = vrcp.pop %v2096
      %v2110 = vmul.f32 %v2096, %v2109
      %v2111 = vsub.f32 1.0, %v2110
      %v2112 = vmul.f32 %v2109, %v2111
      %v2113 = vadd.f32 %v2109, %v2112
      %vm2114 = vweird.f32 %v2096
      %vm2115 = vweird.f32 %v2109
      %vm2116 = vmor %vm2114, %vm2115
      %v2117 = vsel %vm2116, %v2109, %v2113
      %v2118 = vand.u32 2147483647, %v2096
      %vm2119 = vcmp.eq.f32.partialorder %v2118, 8.507059e+37
      %v2120 = vand.u32 %v2096, 2147483648
      %v2121 = vor.u32 1.1754944e-38, %v2120
      %v2122 = vsel %vm2119, %v2121, %v2117
      %v2123 = vmul.f32 %v2071, %v2122
      %v2124 = vrcp.pop %v2108
      %v2125 = vmul.f32 %v2108, %v2124
      %v2126 = vsub.f32 1.0, %v2125
      %v2127 = vmul.f32 %v2124, %v2126
      %v2128 = vadd.f32 %v2124, %v2127
      %vm2129 = vweird.f32 %v2108
      %vm2130 = vweird.f32 %v2124
      %vm2131 = vmor %vm2129, %vm2130
      %v2132 = vsel %vm2131, %v2124, %v2128
      %v2133 = vand.u32 2147483647, %v2108
      %vm2134 = vcmp.eq.f32.partialorder %v2133, 8.507059e+37
      %v2135 = vand.u32 %v2108, 2147483648
      %v2136 = vor.u32 1.1754944e-38, %v2135
      %v2137 = vsel %vm2134, %v2136, %v2132
      %v2138 = vmul.f32 %v2072, %v2137
      %s2139 = scalar_lea.vmem %s8, 2
      %v2140 = vld [vmem:[%s2139] sm:$0x1]
      %v2142 = vperm.slane %v2140, 0
      %v2144 = vmul.f32 %v2123, %v2142
      %v2145 = vmul.f32 %v2138, %v2142
      %s2146 = scalar_lea.vmem %s9, 2
      %v2147 = vld [vmem:[%s2146] sm:$0x1]
      %v2149 = vperm.slane %v2147, 0
      %v2151 = vadd.f32 %v2144, %v2149
      %v2152 = vadd.f32 %v2145, %v2149
      %v2153 = vmax.f32 %v2151, 0.0
      %v2154 = vmax.f32 %v2152, 0.0
      %v2155 = vld [vmem:[%s10] sm:$0xff]
      %v2156 = vld [vmem:[%s10 + $0x8] sm:$0xff]
      %v2157 = vld [vmem:[%s10 + $0x10] sm:$0xff]
      %v2158 = vld [vmem:[%s10 + $0x18] sm:$0xff]
      %v2159 = vld [vmem:[%s10 + $0x20] sm:$0xff]
      %v2160 = vld [vmem:[%s10 + $0x28] sm:$0xff]
      %v2161 = vld [vmem:[%s10 + $0x30] sm:$0xff]
      %v2162 = vld [vmem:[%s10 + $0x38] sm:$0xff]
      %v2163 = vld [vmem:[%s11] sm:$0x1]
      %v2165 = vperm.slane %v2163, 0
      %v2168 = vsel %vm756, %v2153, 0
      %v2171 = vsel %vm756, %v2154, 0
      %2173 = vmatpush.msra.mxu0 0.0
      %2174 = vmatpush.msra.mxu0 0.0
      %2175 = vmatpush.msra.mxu0 0.0
      %2176 = vmatpush.msra.mxu0 0.0
      %2177 = vmatpush.msra.mxu0 0.0
      %2178 = vmatpush.msra.mxu0 0.0
      %2179 = vmatpush.msra.mxu0 0.0
      %2180 = vmatpush.msra.mxu0 0.0
      %2181 = vmatpush.msra.mxu0 %v2162
      %2182 = vmatpush.msra.mxu0 %v2161
      %2183 = vmatpush.msra.mxu0 %v2160
      %2184 = vmatpush.msra.mxu0 %v2159
      %2185 = vmatpush.msra.mxu0 %v2158
      %2186 = vmatpush.msra.mxu0 %v2157
      %2187 = vmatpush.msra.mxu0 %v2156
      %2188 = vmatpush.msra.mxu0 %v2155
      %2189 = vmatmul.f32.gmra.mxu0 %v2168
      %v2190 = vpop.f32.mrf.mxu0
      %v2191 = vadd.f32 %v2165, %v2190
      %2192 = vmatmul.f32.gmra.mxu0 %v2171
      %v2193 = vpop.f32.mrf.mxu0
      %v2194 = vadd.f32 %v2165, %v2193
      %2195 = vdwg.mxu0
      %v2196 = vmax.f32 %v2191, 0.0
      %v2197 = vmax.f32 %v2194, 0.0
      %v2198 = vld [vmem:[%s12] sm:$0xff]
      %v2199 = vld [vmem:[%s12 + $0x8] sm:$0xff]
      %v2200 = vld [vmem:[%s12 + $0x10] sm:$0xff]
      %v2201 = vld [vmem:[%s12 + $0x18] sm:$0xff]
      %v2202 = vld [vmem:[%s13] sm:$0x1]
      %v2204 = vperm.slane %v2202, 0
      %v2207 = vsel %vm716, %v2196, 0
      %v2210 = vsel %vm716, %v2197, 0
      %2212 = vmatpush.msra.mxu0 0.0
      %2213 = vmatpush.msra.mxu0 0.0
      %2214 = vmatpush.msra.mxu0 0.0
      %2215 = vmatpush.msra.mxu0 0.0
      %2216 = vmatpush.msra.mxu0 0.0
      %2217 = vmatpush.msra.mxu0 0.0
      %2218 = vmatpush.msra.mxu0 0.0
      %2219 = vmatpush.msra.mxu0 0.0
      %2220 = vmatpush.msra.mxu0 0.0
      %2221 = vmatpush.msra.mxu0 0.0
      %2222 = vmatpush.msra.mxu0 0.0
      %2223 = vmatpush.msra.mxu0 0.0
      %2224 = vmatpush.msra.mxu0 %v2201
      %2225 = vmatpush.msra.mxu0 %v2200
      %2226 = vmatpush.msra.mxu0 %v2199
      %2227 = vmatpush.msra.mxu0 %v2198
      %2228 = vmatmul.f32.gmra.mxu0 %v2207
      %v2229 = vpop.f32.mrf.mxu0
      %v2230 = vadd.f32 %v2204, %v2229
      %2231 = vmatmul.f32.gmra.mxu0 %v2210
      %v2232 = vpop.f32.mrf.mxu0
      %v2233 = vadd.f32 %v2204, %v2232
      %2234 = vdwg.mxu0
      %vm2235 = vcmask 31744
      %v2236 = vsel %vm2235, %v2230, -inf
      %2237 = vmax.xlane.f32.xlu0 %v2236
      %v2238 = vpop.xlane.xlu0 %2237
      %v2239 = vsel %vm2235, %v2233, -inf
      %2240 = vmax.xlane.f32.xlu0 %v2239
      %v2241 = vpop.xlane.xlu0 %2240
      %v2242 = vsub.f32 %v2230, %v2238
      %v2243 = vsub.f32 %v2233, %v2241
      %v2244 = vmul.f32 %v2242, 1.442695
      %v2245 = vpow.pop %v2244
      %v2246 = vmul.f32 %v2243, 1.442695
      %v2247 = vpow.pop %v2246
      %v2248 = vsel %vm2235, %v2245, 0.0
      %2249 = vadd.xlane.f32.xlu0 %v2248
      %v2250 = vpop.xlane.xlu0 %2249
      %v2251 = vsel %vm2235, %v2247, 0.0
      %2252 = vadd.xlane.f32.xlu0 %v2251
      %v2253 = vpop.xlane.xlu0 %2252
      %v2254 = vlog2.pop %v2250
      %v2255 = vmul.f32 %v2254, 0.6931472
      %v2256 = vlog2.pop %v2253
      %v2257 = vmul.f32 %v2256, 0.6931472
      %v2258 = vadd.f32 %v2255, %v2238
      %v2259 = vadd.f32 %v2257, %v2241
      %v2260 = vsub.f32 %v2230, %v2258
      %v2261 = vsub.f32 %v2233, %v2259
      %2262 = vst.msk [vmem:[%s622] sm:$0xff] %vm2235, %v2260
      %2263 = vst.msk [vmem:[%s622 + $0x8] sm:$0xff] %vm2235, %v2261
      %p2264 = scmp.lt.s32.totalorder %s30, 3
      %s2265 = scalar_select %p2264, %s30, 3
      %s2266 = smul.addr %s2265, 2
      %s2267 = smul.addr %s2266, 8
      %s2268 = scalar_lea.vmem %s19, %s2267
      // Predicated region
      $region97: #{tpu_custom_call.1} parent=95 // pred_check
        %p2269 = pneg %p457
      $region98: #{tpu_custom_call.1} parent=95 // pred_check_branch
        %2271 = sbr.rel (%p2269) target = $region100
      $region99: #{tpu_custom_call.1} parent=95 // pred_region
        _
      $region100: #{tpu_custom_call.1} parent=95 // pred_fallthru
        _
    $region96: #{tpu_custom_call.1} parent=5 // pred_fallthru
      _
    %p2272 = scmp.le.s32.totalorder 2, %s25
    // Predicated region
    $region101: #{tpu_custom_call.1} parent=5 // pred_check
      %p2273 = pneg %p2272
    $region102: #{tpu_custom_call.1} parent=5 // pred_check_branch
      %2275 = sbr.rel (%p2273) target = $region104
    $region103: #{tpu_custom_call.1} parent=5 // pred_region
      %s2276 = ssub.s32 %s25, 2
      // Predicated region
      $region105: #{tpu_custom_call.1} parent=103 // pred_check
        %p2277 = pneg %p463
      $region106: #{tpu_custom_call.1} parent=103 // pred_check_branch
        %2279 = sbr.rel (%p2277) target = $region108
      $region107: #{tpu_custom_call.1} parent=103 // pred_region
        %p2280 = scmp.lt.s32.totalorder %s31, 3
        %s2281 = scalar_select %p2280, %s31, 3
        %s2282 = smul.addr %s2281, 2
        %s2283 = smul.addr %s2282, 8
        %s2284 = scalar_lea.vmem %s19, %s2283
      $region108: #{tpu_custom_call.1} parent=103 // pred_fallthru
        _
    $region104: #{tpu_custom_call.1} parent=5 // pred_fallthru
      _
  $region6: #{tpu_custom_call.1} parent=0 // loop_footer
    %s29 = sadd.s32 1, %s25
  $region7: #{tpu_custom_call.1} parent=0 // loop_footer_branch
    %24 = sbr.rel target = $region3
  $region8: #{tpu_custom_call.1} parent=0 // loop_exit
    _

</llo_original>
